<compile_context>
chip_gen: v5e
topology: v5e:2x2
jax: 0.10.0
libtpu: 0.0.40
codegen_flags: <defaults>
</compile_context>

<pallas_src>
import numpy as np
import jax
import jax.numpy as jnp
from jax.experimental import pallas as pl
from jax.experimental.pallas import tpu as pltpu


# ---------------------------------------------------------------------------
# Host-side weight construction (matches PyTorch _upsample_bicubic2d_aa,
# antialias=True, align_corners=False).  Built in float64.
# ---------------------------------------------------------------------------
def _bicubic_aa_weights(in_size: int, out_size: int) -> np.ndarray:
    a = -0.5

    def filt(x: float) -> float:
        x = abs(x)
        if x < 1.0:
            return ((a + 2.0) * x - (a + 3.0)) * x * x + 1.0
        if x < 2.0:
            return (((x - 5.0) * x + 8.0) * x - 4.0) * a
        return 0.0

    scale = in_size / out_size
    support = 2.0 * scale if scale >= 1.0 else 2.0
    invscale = 1.0 / scale if scale >= 1.0 else 1.0

    w = np.zeros((out_size, in_size), dtype=np.float64)
    for i in range(out_size):
        center = scale * (i + 0.5)
        xmin = max(int(center - support + 0.5), 0)
        xmax = min(int(center + support + 0.5), in_size)
        ws = np.array(
            [filt((j + xmin - center + 0.5) * invscale) for j in range(xmax - xmin)],
            dtype=np.float64,
        )
        total = ws.sum()
        if total != 0.0:
            ws = ws / total
        w[i, xmin:xmax] = ws
    return w  # float64, (out_size, in_size)


def _clamp(v, min_val, max_val):
    if min_val is not None:
        v = jnp.maximum(v, min_val)
    if max_val is not None:
        v = jnp.minimum(v, max_val)
    return v


# ---------------------------------------------------------------------------
# Kernel bodies.
#   use_flat=True : batch folded into MXU M dim (one big matmul per axis) +
#                   per-image minor transposes (preferred, best MXU fill).
#   use_flat=False: batched einsums (reference-documented patterns) — fallback.
# ---------------------------------------------------------------------------
def _make_composite_kernel(op_dtype, use_flat, precision):
    """No-clamp fast path: Y = Mc @ X @ Mc^T with Mc = Wu @ Wd precomputed."""

    def kernel(x_ref, mcT_ref, o_ref):
        bt, s, _ = x_ref.shape
        mcT = mcT_ref[...]                                           # (S, S)
        if use_flat:
            x = x_ref[...].astype(op_dtype).reshape(bt * s, s)
            a = jnp.dot(x, mcT, preferred_element_type=jnp.float32,
                        precision=precision)                         # (Bt*S, S) f32
            at = jnp.swapaxes(a.reshape(bt, s, s), 1, 2)
            at = at.reshape(bt * s, s).astype(op_dtype)
            yt = jnp.dot(at, mcT, preferred_element_type=jnp.float32,
                         precision=precision)                        # Y^T per image
            y = jnp.swapaxes(yt.reshape(bt, s, s), 1, 2)
            o_ref[...] = y.astype(o_ref.dtype)
        else:
            x = x_ref[...].astype(op_dtype)
            mcT_b = jnp.broadcast_to(mcT, (bt, s, s))
            mc_b = jnp.broadcast_to(mcT.T, (bt, s, s))
            a = jnp.einsum("brc,bcj->brj", x, mcT_b,
                           preferred_element_type=jnp.float32, precision=precision)
            y = jnp.einsum("bir,brj->bij", mc_b, a.astype(op_dtype),
                           preferred_element_type=jnp.float32, precision=precision)
            o_ref[...] = y.astype(o_ref.dtype)

    return kernel


def _make_two_pass_kernel(op_dtype, data_dtype, min_val, max_val, use_flat, precision):
    """Clamp path: downsample, clamp (+ materialize in data dtype), upsample, clamp."""

    def kernel(x_ref, wdT_ref, wuT_ref, o_ref):
        bt, s, _ = x_ref.shape
        l = wdT_ref.shape[1]
        wdT = wdT_ref[...]                                           # (S, L)
        wuT = wuT_ref[...]                                           # (L, S)
        if use_flat:
            x = x_ref[...].astype(op_dtype).reshape(bt * s, s)
            # downsample: W axis, then H axis via per-image minor transpose
            a = jnp.dot(x, wdT, preferred_element_type=jnp.float32,
                        precision=precision)                         # (Bt*S, L)
            at = jnp.swapaxes(a.reshape(bt, s, l), 1, 2)
            at = at.reshape(bt * l, s).astype(op_dtype)
            d = jnp.dot(at, wdT, preferred_element_type=jnp.float32,
                        precision=precision)                         # (Bt*L, L) = D^T
            d = _clamp(d, min_val, max_val).astype(data_dtype).astype(op_dtype)
            # upsample: W axis, then H axis
            e = jnp.dot(d, wuT, preferred_element_type=jnp.float32,
                        precision=precision)                         # (Bt*L, S)
            et = jnp.swapaxes(e.reshape(bt, l, s), 1, 2)
            et = et.reshape(bt * s, l).astype(op_dtype)
            u = jnp.dot(et, wuT, preferred_element_type=jnp.float32,
                        precision=precision)                         # (Bt*S, S)
            u = _clamp(u, min_val, max_val)
            o_ref[...] = u.reshape(bt, s, s).astype(o_ref.dtype)
        else:
            x = x_ref[...].astype(op_dtype)
            wdT_b = jnp.broadcast_to(wdT, (bt, s, l))
            wd_b = jnp.broadcast_to(wdT.T, (bt, l, s))
            wuT_b = jnp.broadcast_to(wuT, (bt, l, s))
            wu_b = jnp.broadcast_to(wuT.T, (bt, s, l))
            a = jnp.einsum("brc,bcq->brq", x, wdT_b,
                           preferred_element_type=jnp.float32, precision=precision)
            d = jnp.einsum("bpr,brq->bpq", wd_b, a.astype(op_dtype),
                           preferred_element_type=jnp.float32, precision=precision)
            d = _clamp(d, min_val, max_val).astype(data_dtype).astype(op_dtype)
            e = jnp.einsum("bip,bpq->biq", wu_b, d,
                           preferred_element_type=jnp.float32, precision=precision)
            u = jnp.einsum("biq,bqj->bij", e.astype(op_dtype), wuT_b,
                           preferred_element_type=jnp.float32, precision=precision)
            u = _clamp(u, min_val, max_val)
            o_ref[...] = u.astype(o_ref.dtype)

    return kernel


# ---------------------------------------------------------------------------
# Tiling / VMEM heuristics.
# ---------------------------------------------------------------------------
def _vmem_limit_bytes() -> int:
    cap = 128 << 20
    try:
        info = pltpu.get_tpu_info()
        cap = int(getattr(info, "vmem_capacity_bytes", cap)) or cap
    except Exception:
        pass
    return int(min(cap * 3 // 4, 100 << 20))


def _pick_batch_tile(B, S, L, elem_bytes, weight_bytes, vmem_budget, two_pass):
    # Bound the largest in-kernel value (~1 MiB f32) to keep spill pressure /
    # compile time sane, and byte-target the pipelined input block.
    max_elems = 256 * 1024
    cap_val = max(1, max_elems // max(S * max(S, L), 1))
    cap_io = max(1, (4 << 20) // max(S * S * elem_bytes, 1))
    # Double-buffered in/out blocks + rough f32 intermediate footprint per image;
    # weights are resident (count twice for double-buffering) off the top.
    per_img = 2 * 2 * S * S * elem_bytes + 3 * S * max(S, L) * 4
    if two_pass:
        per_img += 2 * (S * L + L * L) * 4
    avail = max(vmem_budget - 2 * weight_bytes, 1 << 20)
    cap_mem = max(1, avail // per_img)
    bt = int(min(B, cap_val, cap_io, cap_mem))
    while B % bt:
        bt -= 1
    # Give multi-TensorCore parts (v7x) at least two grid steps when the input
    # is large enough that splitting keeps blocks >= ~2 MiB. No forced split on
    # single-core generations / tiny inputs.
    if B // bt == 1 and B > 1 and B * S * S * elem_bytes >= (4 << 20):
        bt = max(d for d in range(1, B // 2 + 1) if B % d == 0)
    return bt


_FLAT_VARIANT_OK = None  # cached: does the transpose-based variant lower here?


# ---------------------------------------------------------------------------
# Public wrapper (mirrors SuperResolutionTransform.forward).
# ---------------------------------------------------------------------------
def super_resolution_transform(
    batch: dict,
    *,
    size: int,
    low_res_size: int,
    data_field: str = "x",
    low_res_field: str = "low_res",
    min_val=None,
    max_val=None,
    fast_math: bool = False,
    precision=None,
    batch_tile=None,
):
    global _FLAT_VARIANT_OK

    assert data_field in batch, f"SuperResolutionTransform expects key {data_field}"
    data = batch[data_field]
    N, C, H, W = data.shape
    assert H == size and W == size, "input spatial dims must equal `size`"

    # TODO(synk): augmentation_func is an arbitrary user callable applied to the
    # low-res image; no fixed Pallas equivalent (module default is None).

    S, L = int(size), int(low_res_size)
    data_dtype = data.dtype if jnp.issubdtype(data.dtype, jnp.floating) else jnp.float32
    op_dtype = jnp.bfloat16 if (data_dtype == jnp.bfloat16 or fast_math) else jnp.float32

    x = data.reshape(N * C, S, S)
    if x.dtype != data_dtype:
        x = x.astype(data_dtype)
    B = N * C

    # Replicates the PyTorch module's `if self.min_val or self.max_val:` truthiness.
    do_clamp = bool(min_val or max_val)

    wd = _bicubic_aa_weights(S, L)                     # (L, S) downsample, float64
    wu = _bicubic_aa_weights(L, S)                     # (S, L) upsample,   float64
    if do_clamp:
        weights = (
            jnp.asarray(np.ascontiguousarray(wd.T), dtype=op_dtype),  # Wd^T (S, L)
            jnp.asarray(np.ascontiguousarray(wu.T), dtype=op_dtype),  # Wu^T (L, S)
        )
        weight_bytes = 2 * S * L * np.dtype(op_dtype).itemsize
    else:
        mc = wu @ wd                                   # composite (S, S), float64
        weights = (jnp.asarray(np.ascontiguousarray(mc.T), dtype=op_dtype),)  # Mc^T
        weight_bytes = S * S * np.dtype(op_dtype).itemsize

    vmem_limit = _vmem_limit_bytes()
    eb = np.dtype(data_dtype).itemsize
    Bt = batch_tile or _pick_batch_tile(
        B, S, L, eb, weight_bytes, int(vmem_limit * 0.6), do_clamp
    )
    assert B % Bt == 0
    grid = (B // Bt,)

    # Flat variant needs sublane-clean reshapes (S, L multiples of 8).
    flat_ok = (S % 8 == 0) and (L % 8 == 0 or not do_clamp)

    def build_call(use_flat):
        if do_clamp:
            kernel = _make_two_pass_kernel(
                op_dtype, data_dtype, min_val, max_val, use_flat, precision
            )
            w_specs = [
                pl.BlockSpec((S, L), lambda i: (0, 0)),
                pl.BlockSpec((L, S), lambda i: (0, 0)),
            ]
            flops = 4 * B * S * L * (S + L)
        else:
            kernel = _make_composite_kernel(op_dtype, use_flat, precision)
            w_specs = [pl.BlockSpec((S, S), lambda i: (0, 0))]
            flops = 4 * B * S * S * S
        bytes_accessed = 2 * B * S * S * eb + 2 * weight_bytes
        return pl.pallas_call(
            kernel,
            out_shape=jax.ShapeDtypeStruct((B, S, S), data_dtype),
            grid=grid,
            in_specs=[pl.BlockSpec((Bt, S, S), lambda i: (i, 0, 0))] + w_specs,
            out_specs=pl.BlockSpec((Bt, S, S), lambda i: (i, 0, 0)),
            compiler_params=pltpu.CompilerParams(
                dimension_semantics=("parallel",),
                vmem_limit_bytes=vmem_limit,
            ),
            cost_estimate=pl.CostEstimate(
                flops=int(flops), transcendentals=0, bytes_accessed=int(bytes_accessed)
            ),
        )

    use_flat = flat_ok and (_FLAT_VARIANT_OK is not False)
    try:
        up = build_call(use_flat)(x, *weights)
        if use_flat:
            _FLAT_VARIANT_OK = True
    except Exception:
        if not use_flat:
            raise
        _FLAT_VARIANT_OK = False
        up = build_call(False)(x, *weights)

    out = dict(batch)
    out[low_res_field] = up.reshape(N, C, S, S)
    return out


if __name__ == "__main__":
    key = jax.random.PRNGKey(0)
    N, C, SIZE, LOW = 2, 4, 16, 8
    x = jax.random.normal(key, (N, C, SIZE, SIZE), dtype=jnp.float32)
    batch = {"x": x}

    # float64 numpy reference (same weight construction, explicit two-pass).
    wd = _bicubic_aa_weights(SIZE, LOW)
    wu = _bicubic_aa_weights(LOW, SIZE)
    xh = np.asarray(x, dtype=np.float64).reshape(N * C, SIZE, SIZE)
    down = np.einsum("pr,brc,qc->bpq", wd, xh, wd)
    ref = np.einsum("ip,bpq,jq->bij", wu, down, wu).reshape(N, C, SIZE, SIZE)

    # Default path (no clamp): composite-matrix fast path.
    result = super_resolution_transform(batch, size=SIZE, low_res_size=LOW)
    low_res = jax.block_until_ready(result["low_res"])
    assert low_res.shape == (N, C, SIZE, SIZE)
    assert low_res.dtype == x.dtype
    assert result["x"].shape == (N, C, SIZE, SIZE)
    err = float(np.max(np.abs(np.asarray(low_res, np.float64) - ref)))
    assert np.allclose(np.asarray(low_res, np.float64), ref, rtol=5e-2, atol=5e-2), err

    # Clamp path: two-pass kernel with clamps.
    result_c = super_resolution_transform(
        batch, size=SIZE, low_res_size=LOW, min_val=-1.0, max_val=1.0
    )
    low_res_c = jax.block_until_ready(result_c["low_res"])
    ref_c = np.einsum("ip,bpq,jq->bij", wu, np.clip(down, -1.0, 1.0), wu)
    ref_c = np.clip(ref_c, -1.0, 1.0).reshape(N, C, SIZE, SIZE)
    assert low_res_c.shape == (N, C, SIZE, SIZE)
    assert bool(jnp.all(low_res_c <= 1.0)) and bool(jnp.all(low_res_c >= -1.0))
    assert np.allclose(np.asarray(low_res_c, np.float64), ref_c, rtol=5e-2, atol=5e-2)

    print("KERNEL_OK")
</pallas_src>

<mosaic_0001>
module attributes {stable_mosaic.version = 11 : i64} {
  func.func @kernel(%arg0: i32, %arg1: memref<8x16x16xf32, #tpu.memory_space<vmem>>, %arg2: memref<16x16xf32, #tpu.memory_space<vmem>>, %arg3: memref<8x16x16xf32, #tpu.memory_space<vmem>>) attributes {dimension_semantics = [#tpu.dimension_semantics<parallel>], iteration_bounds = array<i64: 1>, scalar_prefetch = 0 : i64, scratch_operands = 0 : i64, tpu.core_type = #tpu.core_type<tc>, window_params = [{transform_indices = @transform_0, window_bounds = array<i64: 8, 16, 16>}, {pipeline_mode = #tpu.pipeline_mode<synchronous>, transform_indices = @transform_1, window_bounds = array<i64: 16, 16>}, {transform_indices = @transform_2, window_bounds = array<i64: 8, 16, 16>}]} {
    %c0 = arith.constant 0 : index
    %c0_0 = arith.constant 0 : index
    %0 = vector.load %arg2[%c0, %c0_0] : memref<16x16xf32, #tpu.memory_space<vmem>>, vector<16x16xf32>
    %c0_1 = arith.constant 0 : index
    %c0_2 = arith.constant 0 : index
    %c0_3 = arith.constant 0 : index
    %1 = vector.load %arg1[%c0_1, %c0_2, %c0_3] : memref<8x16x16xf32, #tpu.memory_space<vmem>>, vector<8x16x16xf32>
    %2 = vector.shape_cast %1 : vector<8x16x16xf32> to vector<128x16xf32>
    %cst = arith.constant dense<0.000000e+00> : vector<128x16xf32>
    %3 = tpu.matmul %2, %0, %cst {dimension_numbers = #tpu.dot_dimension_numbers<[1], [0], [0], [1], [0, 0, 1, 1], [], []>} : vector<128x16xf32>, vector<16x16xf32>, vector<128x16xf32> -> vector<128x16xf32>
    %4 = vector.shape_cast %3 : vector<128x16xf32> to vector<8x16x16xf32>
    %5 = tpu.transpose %4, [0, 2, 1] : vector<8x16x16xf32> -> vector<8x16x16xf32>
    %6 = vector.shape_cast %5 : vector<8x16x16xf32> to vector<128x16xf32>
    %cst_4 = arith.constant dense<0.000000e+00> : vector<128x16xf32>
    %7 = tpu.matmul %6, %0, %cst_4 {dimension_numbers = #tpu.dot_dimension_numbers<[1], [0], [0], [1], [0, 0, 1, 1], [], []>} : vector<128x16xf32>, vector<16x16xf32>, vector<128x16xf32> -> vector<128x16xf32>
    %8 = vector.shape_cast %7 : vector<128x16xf32> to vector<8x16x16xf32>
    %9 = tpu.transpose %8, [0, 2, 1] : vector<8x16x16xf32> -> vector<8x16x16xf32>
    %c0_5 = arith.constant 0 : index
    %c0_6 = arith.constant 0 : index
    %c0_7 = arith.constant 0 : index
    %10 = vector.load %arg3[%c0_5, %c0_6, %c0_7] : memref<8x16x16xf32, #tpu.memory_space<vmem>>, vector<8x16x16xf32>
    tpu.vector_store %arg3[%c0_5, %c0_6, %c0_7], %9 {strides = array<i32>} : memref<8x16x16xf32, #tpu.memory_space<vmem>>, vector<8x16x16xf32>,
    return
  }
  func.func @transform_0(%arg0: i32) -> (i32, i32, i32) {
    %c0_i32 = arith.constant 0 : i32
    %c0_i32_0 = arith.constant 0 : i32
    %c0_i32_1 = arith.constant 0 : i32
    return %arg0, %c0_i32, %c0_i32_0 : i32, i32, i32
  }
  func.func @transform_1(%arg0: i32) -> (i32, i32) {
    %c0_i32 = arith.constant 0 : i32
    %c0_i32_0 = arith.constant 0 : i32
    %c0_i32_1 = arith.constant 0 : i32
    return %c0_i32, %c0_i32_0 : i32, i32
  }
  func.func @transform_2(%arg0: i32) -> (i32, i32, i32) {
    %c0_i32 = arith.constant 0 : i32
    %c0_i32_0 = arith.constant 0 : i32
    %c0_i32_1 = arith.constant 0 : i32
    return %arg0, %c0_i32, %c0_i32_0 : i32, i32, i32
  }
}

module attributes {stable_mosaic.version = 11 : i64} {
  func.func @kernel(%arg0: i32, %arg1: memref<8x16x16xf32, #tpu.memory_space<vmem>>, %arg2: memref<16x16xf32, #tpu.memory_space<vmem>>, %arg3: memref<8x16x16xf32, #tpu.memory_space<vmem>>) attributes {dimension_semantics = [#tpu.dimension_semantics<parallel>], iteration_bounds = array<i64: 1>, scalar_prefetch = 0 : i64, scratch_operands = 0 : i64, tpu.core_type = #tpu.core_type<tc>, window_params = [{transform_indices = @transform_0, window_bounds = array<i64: 8, 16, 16>}, {pipeline_mode = #tpu.pipeline_mode<synchronous>, transform_indices = @transform_1, window_bounds = array<i64: 16, 16>}, {transform_indices = @transform_2, window_bounds = array<i64: 8, 16, 16>}]} {
    %c0 = arith.constant 0 : index
    %c0_0 = arith.constant 0 : index
    %0 = vector.load %arg2[%c0, %c0_0] : memref<16x16xf32, #tpu.memory_space<vmem>>, vector<16x16xf32>
    %c0_1 = arith.constant 0 : index
    %c0_2 = arith.constant 0 : index
    %c0_3 = arith.constant 0 : index
    %1 = vector.load %arg1[%c0_1, %c0_2, %c0_3] : memref<8x16x16xf32, #tpu.memory_space<vmem>>, vector<8x16x16xf32>
    %2 = vector.shape_cast %0 : vector<16x16xf32> to vector<1x16x16xf32>
    %3 = vector.broadcast %2 : vector<1x16x16xf32> to vector<8x16x16xf32>
    %4 = tpu.transpose %0, [1, 0] : vector<16x16xf32> -> vector<16x16xf32>
    %5 = vector.shape_cast %4 : vector<16x16xf32> to vector<1x16x16xf32>
    %6 = vector.broadcast %5 : vector<1x16x16xf32> to vector<8x16x16xf32>
    "tpu.trace_start"() <{level = 10 : i32, message = "brc,bcj->brj"}> : () -> ()
    %cst = arith.constant dense<0.000000e+00> : vector<8x16x16xf32>
    %7 = tpu.matmul %1, %3, %cst {dimension_numbers = #tpu.dot_dimension_numbers<[2], [1], [1], [2], [0, 0, 0, 1, 1, 2], [0], [0]>} : vector<8x16x16xf32>, vector<8x16x16xf32>, vector<8x16x16xf32> -> vector<8x16x16xf32>
    "tpu.trace_stop"() : () -> ()
    "tpu.trace_start"() <{level = 10 : i32, message = "bir,brj->bij"}> : () -> ()
    %cst_4 = arith.constant dense<0.000000e+00> : vector<8x16x16xf32>
    %8 = tpu.matmul %6, %7, %cst_4 {dimension_numbers = #tpu.dot_dimension_numbers<[2], [1], [1], [2], [0, 0, 0, 1, 1, 2], [0], [0]>} : vector<8x16x16xf32>, vector<8x16x16xf32>, vector<8x16x16xf32> -> vector<8x16x16xf32>
    "tpu.trace_stop"() : () -> ()
    %c0_5 = arith.constant 0 : index
    %c0_6 = arith.constant 0 : index
    %c0_7 = arith.constant 0 : index
    %9 = vector.load %arg3[%c0_5, %c0_6, %c0_7] : memref<8x16x16xf32, #tpu.memory_space<vmem>>, vector<8x16x16xf32>
    tpu.vector_store %arg3[%c0_5, %c0_6, %c0_7], %8 {strides = array<i32>} : memref<8x16x16xf32, #tpu.memory_space<vmem>>, vector<8x16x16xf32>,
    return
  }
  func.func @transform_0(%arg0: i32) -> (i32, i32, i32) {
    %c0_i32 = arith.constant 0 : i32
    %c0_i32_0 = arith.constant 0 : i32
    %c0_i32_1 = arith.constant 0 : i32
    return %arg0, %c0_i32, %c0_i32_0 : i32, i32, i32
  }
  func.func @transform_1(%arg0: i32) -> (i32, i32) {
    %c0_i32 = arith.constant 0 : i32
    %c0_i32_0 = arith.constant 0 : i32
    %c0_i32_1 = arith.constant 0 : i32
    return %c0_i32, %c0_i32_0 : i32, i32
  }
  func.func @transform_2(%arg0: i32) -> (i32, i32, i32) {
    %c0_i32 = arith.constant 0 : i32
    %c0_i32_0 = arith.constant 0 : i32
    %c0_i32_1 = arith.constant 0 : i32
    return %arg0, %c0_i32, %c0_i32_0 : i32, i32, i32
  }
}

</mosaic_0001>

<llo_original>
// kernel: tpu_custom_call.1
$region0: #{tpu_custom_call.1}
  #allocation0 [shape = 'u32[]', space=smem, size = 0x4, offset = 0x4, fixed_abs, tag = 'smem constant byte address 0x4 - core index']
  #allocation1 [shape = 'u32[72,128]{1,0:T(1,128)}', space=vmem, size = 0x9000, scoped, tag = 'internal scratch']
  %s0 = inlined_call_operand.hbm [shape: f32[8,16,16], index: 0, kind: input, shape index: {}]
  %s1 = inlined_call_operand.hbm [shape: f32[16,16], index: 1, kind: input, shape index: {}]
  %s2 = inlined_call_operand.hbm [shape: f32[8,16,16], index: 2, kind: output, shape index: {}]
  %s3 = sld [smem:[#allocation0]]
  $region26: #{tpu_custom_call.1} parent=0
    _
  %s5 = ssub.s32 1, %s3
  %s6 = scalar_select 0, %s5, %s3
  $region1: #{tpu_custom_call.1} parent=0
    #allocation2 [shape = 'u8[65536]{0}', space=vmem, size = 0x10000, scoped, tag = 'input window, operand 0, single buffered']
    #allocation3 [shape = 's32[1]{0}', space=sflag, size = 0x4, scoped, tag = 'scoped memory for tpu_custom_call.1']
    #allocation4 [shape = 's32[1]{0}', space=sflag, size = 0x4, scoped, tag = 'scoped memory for tpu_custom_call.1']
    #allocation5 [shape = 'u8[8192]{0}', space=vmem, size = 0x2000, scoped, tag = 'input window, operand 1, single buffered']
    #allocation6 [shape = 's32[1]{0}', space=sflag, size = 0x4, scoped, tag = 'scoped memory for tpu_custom_call.1']
    #allocation7 [shape = 'u8[65536]{0}', space=vmem, size = 0x10000, scoped, tag = 'output window, operand 0, single buffered']
    %7 = vsyncpa [#allocation3], 0
    %8 = vsyncpa [#allocation6], 0
    %9 = vsyncpa [#allocation4], 0
    // Predicated region
    $region2: #{tpu_custom_call.1} parent=1 // pred_check
      _
    $region3: #{tpu_custom_call.1} parent=1 // pred_check_branch
      %11 = sbr.rel (0) target = $region5
    $region4: #{tpu_custom_call.1} parent=1 // pred_region
      %13 = vsyncadd [#allocation3], 0
      %s14 = sshll.u32 %s0, 4
      %s15 = int_to_ptr.hbm [resolvable:$true] %s14
      %s16 = sshll.u32 [#allocation2], 4
      %s17 = int_to_ptr.vmem [resolvable:$true] %s16
      %22 = dma.hbm_to_vmem [thread:$0]  %s15, 2048, %s17, [#allocation3], 128, 128, 8
    $region5: #{tpu_custom_call.1} parent=1 // pred_fallthru
      _
    // Predicated region
    $region6: #{tpu_custom_call.1} parent=1 // pred_check
      _
    $region7: #{tpu_custom_call.1} parent=1 // pred_check_branch
      %24 = sbr.rel (0) target = $region9
    $region8: #{tpu_custom_call.1} parent=1 // pred_region
      %26 = vsyncadd [#allocation6], 0
      %s27 = sshll.u32 %s1, 4
      %s28 = int_to_ptr.hbm [resolvable:$true] %s27
      %s29 = sshll.u32 [#allocation5], 4
      %s30 = int_to_ptr.vmem [resolvable:$true] %s29
      %35 = dma.hbm_to_vmem [thread:$0]  %s28, 256, %s30, [#allocation6], 128, 128, 8
    $region9: #{tpu_custom_call.1} parent=1 // pred_fallthru
      _
    // Predicated region
    $region10: #{tpu_custom_call.1} parent=1 // pred_check
      _
    $region11: #{tpu_custom_call.1} parent=1 // pred_check_branch
      %37 = sbr.rel (0) target = $region13
    $region12: #{tpu_custom_call.1} parent=1 // pred_region
      %39 = dma.done [#allocation3], 2048
    $region13: #{tpu_custom_call.1} parent=1 // pred_fallthru
      _
    // Predicated region
    $region14: #{tpu_custom_call.1} parent=1 // pred_check
      _
    $region15: #{tpu_custom_call.1} parent=1 // pred_check_branch
      %41 = sbr.rel (0) target = $region17
    $region16: #{tpu_custom_call.1} parent=1 // pred_region
      %43 = dma.done [#allocation6], 256
    $region17: #{tpu_custom_call.1} parent=1 // pred_fallthru
      _
    %v44 = vld [vmem:[#allocation5] sm:$0xff]
    %v45 = vld [vmem:[#allocation5 + $0x8] sm:$0xff]
    %v46 = vld [vmem:[#allocation2] sm:$0xff]
    %v47 = vld [vmem:[#allocation2 + $0x8] sm:$0xff]
    %v48 = vld [vmem:[#allocation2 + $0x10] sm:$0xff]
    %v49 = vld [vmem:[#allocation2 + $0x18] sm:$0xff]
    %v50 = vld [vmem:[#allocation2 + $0x20] sm:$0xff]
    %v51 = vld [vmem:[#allocation2 + $0x28] sm:$0xff]
    %v52 = vld [vmem:[#allocation2 + $0x30] sm:$0xff]
    %v53 = vld [vmem:[#allocation2 + $0x38] sm:$0xff]
    %v54 = vld [vmem:[#allocation2 + $0x40] sm:$0xff]
    %v55 = vld [vmem:[#allocation2 + $0x48] sm:$0xff]
    %v56 = vld [vmem:[#allocation2 + $0x50] sm:$0xff]
    %v57 = vld [vmem:[#allocation2 + $0x58] sm:$0xff]
    %v58 = vld [vmem:[#allocation2 + $0x60] sm:$0xff]
    %v59 = vld [vmem:[#allocation2 + $0x68] sm:$0xff]
    %v60 = vld [vmem:[#allocation2 + $0x70] sm:$0xff]
    %v61 = vld [vmem:[#allocation2 + $0x78] sm:$0xff]
    %vm62 = vcmask 130048
    %v64 = vsel %vm62, %v46, 0
    %v67 = vsel %vm62, %v47, 0
    %v70 = vsel %vm62, %v48, 0
    %v73 = vsel %vm62, %v49, 0
    %v76 = vsel %vm62, %v50, 0
    %v79 = vsel %vm62, %v51, 0
    %v82 = vsel %vm62, %v52, 0
    %v85 = vsel %vm62, %v53, 0
    %v88 = vsel %vm62, %v54, 0
    %v91 = vsel %vm62, %v55, 0
    %v94 = vsel %vm62, %v56, 0
    %v97 = vsel %vm62, %v57, 0
    %v100 = vsel %vm62, %v58, 0
    %v103 = vsel %vm62, %v59, 0
    %v106 = vsel %vm62, %v60, 0
    %v109 = vsel %vm62, %v61, 0
    %111 = vmatpush.msra.mxu0 0.0
    %112 = vmatpush.msra.mxu0 0.0
    %113 = vmatpush.msra.mxu0 0.0
    %114 = vmatpush.msra.mxu0 0.0
    %115 = vmatpush.msra.mxu0 0.0
    %116 = vmatpush.msra.mxu0 0.0
    %117 = vmatpush.msra.mxu0 0.0
    %118 = vmatpush.msra.mxu0 0.0
    %119 = vmatpush.msra.mxu0 0.0
    %120 = vmatpush.msra.mxu0 0.0
    %121 = vmatpush.msra.mxu0 0.0
    %122 = vmatpush.msra.mxu0 0.0
    %123 = vmatpush.msra.mxu0 0.0
    %124 = vmatpush.msra.mxu0 0.0
    %125 = vmatpush.msra.mxu0 %v45
    %126 = vmatpush.msra.mxu0 %v44
    %127 = vmatmul.f32.gmra.mxu0 %v64
    %v128 = vpop.f32.mrf.mxu0
    %v129 = vadd.f32 0.0, %v128
    %130 = vmatmul.f32.gmra.mxu0 %v67
    %v131 = vpop.f32.mrf.mxu0
    %v132 = vadd.f32 0.0, %v131
    %133 = vmatmul.f32.gmra.mxu0 %v70
    %v134 = vpop.f32.mrf.mxu0
    %v135 = vadd.f32 0.0, %v134
    %136 = vmatmul.f32.gmra.mxu0 %v73
    %v137 = vpop.f32.mrf.mxu0
    %v138 = vadd.f32 0.0, %v137
    %139 = vmatmul.f32.gmra.mxu0 %v76
    %v140 = vpop.f32.mrf.mxu0
    %v141 = vadd.f32 0.0, %v140
    %142 = vmatmul.f32.gmra.mxu0 %v79
    %v143 = vpop.f32.mrf.mxu0
    %v144 = vadd.f32 0.0, %v143
    %145 = vmatmul.f32.gmra.mxu0 %v82
    %v146 = vpop.f32.mrf.mxu0
    %v147 = vadd.f32 0.0, %v146
    %148 = vmatmul.f32.gmra.mxu0 %v85
    %v149 = vpop.f32.mrf.mxu0
    %v150 = vadd.f32 0.0, %v149
    %151 = vmatmul.f32.gmra.mxu0 %v88
    %v152 = vpop.f32.mrf.mxu0
    %v153 = vadd.f32 0.0, %v152
    %154 = vmatmul.f32.gmra.mxu0 %v91
    %v155 = vpop.f32.mrf.mxu0
    %v156 = vadd.f32 0.0, %v155
    %157 = vmatmul.f32.gmra.mxu0 %v94
    %v158 = vpop.f32.mrf.mxu0
    %v159 = vadd.f32 0.0, %v158
    %160 = vmatmul.f32.gmra.mxu0 %v97
    %v161 = vpop.f32.mrf.mxu0
    %v162 = vadd.f32 0.0, %v161
    %163 = vmatmul.f32.gmra.mxu0 %v100
    %v164 = vpop.f32.mrf.mxu0
    %v165 = vadd.f32 0.0, %v164
    %166 = vmatmul.f32.gmra.mxu0 %v103
    %v167 = vpop.f32.mrf.mxu0
    %v168 = vadd.f32 0.0, %v167
    %169 = vmatmul.f32.gmra.mxu0 %v106
    %v170 = vpop.f32.mrf.mxu0
    %v171 = vadd.f32 0.0, %v170
    %172 = vmatmul.f32.gmra.mxu0 %v109
    %v173 = vpop.f32.mrf.mxu0
    %v174 = vadd.f32 0.0, %v173
    %175 = vdwg.mxu0
    %176 = vxpose.xlu0.b32.start [1/16] %v129, 128
    %177 = vxpose.xlu0.b32.cont [2/16] %v132, 128
    %178 = vxpose.xlu0.b32.cont [3/16] 0.0, 128
    %179 = vxpose.xlu0.b32.cont [4/16] 0.0, 128
    %180 = vxpose.xlu0.b32.cont [5/16] 0.0, 128
    %181 = vxpose.xlu0.b32.cont [6/16] 0.0, 128
    %182 = vxpose.xlu0.b32.cont [7/16] 0.0, 128
    %183 = vxpose.xlu0.b32.cont [8/16] 0.0, 128
    %184 = vxpose.xlu0.b32.cont [9/16] 0.0, 128
    %185 = vxpose.xlu0.b32.cont [10/16] 0.0, 128
    %186 = vxpose.xlu0.b32.cont [11/16] 0.0, 128
    %187 = vxpose.xlu0.b32.cont [12/16] 0.0, 128
    %188 = vxpose.xlu0.b32.cont [13/16] 0.0, 128
    %189 = vxpose.xlu0.b32.cont [14/16] 0.0, 128
    %190 = vxpose.xlu0.b32.cont [15/16] 0.0, 128
    %191 = vxpose.xlu0.b32.end [16/16] 0.0, 128
    %v192 = vpop.trf.xlu0
    %v193 = vpop.trf.xlu0
    %v194 = vpop.trf.xlu0
    %v195 = vpop.trf.xlu0
    %v196 = vpop.trf.xlu0
    %v197 = vpop.trf.xlu0
    %v198 = vpop.trf.xlu0
    %v199 = vpop.trf.xlu0
    %v200 = vpop.trf.xlu0
    %v201 = vpop.trf.xlu0
    %v202 = vpop.trf.xlu0
    %v203 = vpop.trf.xlu0
    %v204 = vpop.trf.xlu0
    %v205 = vpop.trf.xlu0
    %v206 = vpop.trf.xlu0
    %v207 = vpop.trf.xlu0
    %208 = vxpose.xlu0.b32.start [1/16] %v135, 128
    %209 = vxpose.xlu0.b32.cont [2/16] %v138, 128
    %210 = vxpose.xlu0.b32.cont [3/16] 0.0, 128
    %211 = vxpose.xlu0.b32.cont [4/16] 0.0, 128
    %212 = vxpose.xlu0.b32.cont [5/16] 0.0, 128
    %213 = vxpose.xlu0.b32.cont [6/16] 0.0, 128
    %214 = vxpose.xlu0.b32.cont [7/16] 0.0, 128
    %215 = vxpose.xlu0.b32.cont [8/16] 0.0, 128
    %216 = vxpose.xlu0.b32.cont [9/16] 0.0, 128
    %217 = vxpose.xlu0.b32.cont [10/16] 0.0, 128
    %218 = vxpose.xlu0.b32.cont [11/16] 0.0, 128
    %219 = vxpose.xlu0.b32.cont [12/16] 0.0, 128
    %220 = vxpose.xlu0.b32.cont [13/16] 0.0, 128
    %221 = vxpose.xlu0.b32.cont [14/16] 0.0, 128
    %222 = vxpose.xlu0.b32.cont [15/16] 0.0, 128
    %223 = vxpose.xlu0.b32.end [16/16] 0.0, 128
    %v224 = vpop.trf.xlu0
    %v225 = vpop.trf.xlu0
    %v226 = vpop.trf.xlu0
    %v227 = vpop.trf.xlu0
    %v228 = vpop.trf.xlu0
    %v229 = vpop.trf.xlu0
    %v230 = vpop.trf.xlu0
    %v231 = vpop.trf.xlu0
    %v232 = vpop.trf.xlu0
    %v233 = vpop.trf.xlu0
    %v234 = vpop.trf.xlu0
    %v235 = vpop.trf.xlu0
    %v236 = vpop.trf.xlu0
    %v237 = vpop.trf.xlu0
    %v238 = vpop.trf.xlu0
    %v239 = vpop.trf.xlu0
    %240 = vxpose.xlu0.b32.start [1/16] %v141, 128
    %241 = vxpose.xlu0.b32.cont [2/16] %v144, 128
    %242 = vxpose.xlu0.b32.cont [3/16] 0.0, 128
    %243 = vxpose.xlu0.b32.cont [4/16] 0.0, 128
    %244 = vxpose.xlu0.b32.cont [5/16] 0.0, 128
    %245 = vxpose.xlu0.b32.cont [6/16] 0.0, 128
    %246 = vxpose.xlu0.b32.cont [7/16] 0.0, 128
    %247 = vxpose.xlu0.b32.cont [8/16] 0.0, 128
    %248 = vxpose.xlu0.b32.cont [9/16] 0.0, 128
    %249 = vxpose.xlu0.b32.cont [10/16] 0.0, 128
    %250 = vxpose.xlu0.b32.cont [11/16] 0.0, 128
    %251 = vxpose.xlu0.b32.cont [12/16] 0.0, 128
    %252 = vxpose.xlu0.b32.cont [13/16] 0.0, 128
    %253 = vxpose.xlu0.b32.cont [14/16] 0.0, 128
    %254 = vxpose.xlu0.b32.cont [15/16] 0.0, 128
    %255 = vxpose.xlu0.b32.end [16/16] 0.0, 128
    %v256 = vpop.trf.xlu0
    %v257 = vpop.trf.xlu0
    %v258 = vpop.trf.xlu0
    %v259 = vpop.trf.xlu0
    %v260 = vpop.trf.xlu0
    %v261 = vpop.trf.xlu0
    %v262 = vpop.trf.xlu0
    %v263 = vpop.trf.xlu0
    %v264 = vpop.trf.xlu0
    %v265 = vpop.trf.xlu0
    %v266 = vpop.trf.xlu0
    %v267 = vpop.trf.xlu0
    %v268 = vpop.trf.xlu0
    %v269 = vpop.trf.xlu0
    %v270 = vpop.trf.xlu0
    %v271 = vpop.trf.xlu0
    %272 = vxpose.xlu0.b32.start [1/16] %v147, 128
    %273 = vxpose.xlu0.b32.cont [2/16] %v150, 128
    %274 = vxpose.xlu0.b32.cont [3/16] 0.0, 128
    %275 = vxpose.xlu0.b32.cont [4/16] 0.0, 128
    %276 = vxpose.xlu0.b32.cont [5/16] 0.0, 128
    %277 = vxpose.xlu0.b32.cont [6/16] 0.0, 128
    %278 = vxpose.xlu0.b32.cont [7/16] 0.0, 128
    %279 = vxpose.xlu0.b32.cont [8/16] 0.0, 128
    %280 = vxpose.xlu0.b32.cont [9/16] 0.0, 128
    %281 = vxpose.xlu0.b32.cont [10/16] 0.0, 128
    %282 = vxpose.xlu0.b32.cont [11/16] 0.0, 128
    %283 = vxpose.xlu0.b32.cont [12/16] 0.0, 128
    %284 = vxpose.xlu0.b32.cont [13/16] 0.0, 128
    %285 = vxpose.xlu0.b32.cont [14/16] 0.0, 128
    %286 = vxpose.xlu0.b32.cont [15/16] 0.0, 128
    %287 = vxpose.xlu0.b32.end [16/16] 0.0, 128
    %v288 = vpop.trf.xlu0
    %v289 = vpop.trf.xlu0
    %v290 = vpop.trf.xlu0
    %v291 = vpop.trf.xlu0
    %v292 = vpop.trf.xlu0
    %v293 = vpop.trf.xlu0
    %v294 = vpop.trf.xlu0
    %v295 = vpop.trf.xlu0
    %v296 = vpop.trf.xlu0
    %v297 = vpop.trf.xlu0
    %v298 = vpop.trf.xlu0
    %v299 = vpop.trf.xlu0
    %v300 = vpop.trf.xlu0
    %v301 = vpop.trf.xlu0
    %v302 = vpop.trf.xlu0
    %v303 = vpop.trf.xlu0
    %304 = vxpose.xlu0.b32.start [1/16] %v153, 128
    %305 = vxpose.xlu0.b32.cont [2/16] %v156, 128
    %306 = vxpose.xlu0.b32.cont [3/16] 0.0, 128
    %307 = vxpose.xlu0.b32.cont [4/16] 0.0, 128
    %308 = vxpose.xlu0.b32.cont [5/16] 0.0, 128
    %309 = vxpose.xlu0.b32.cont [6/16] 0.0, 128
    %310 = vxpose.xlu0.b32.cont [7/16] 0.0, 128
    %311 = vxpose.xlu0.b32.cont [8/16] 0.0, 128
    %312 = vxpose.xlu0.b32.cont [9/16] 0.0, 128
    %313 = vxpose.xlu0.b32.cont [10/16] 0.0, 128
    %314 = vxpose.xlu0.b32.cont [11/16] 0.0, 128
    %315 = vxpose.xlu0.b32.cont [12/16] 0.0, 128
    %316 = vxpose.xlu0.b32.cont [13/16] 0.0, 128
    %317 = vxpose.xlu0.b32.cont [14/16] 0.0, 128
    %318 = vxpose.xlu0.b32.cont [15/16] 0.0, 128
    %319 = vxpose.xlu0.b32.end [16/16] 0.0, 128
    %v320 = vpop.trf.xlu0
    %v321 = vpop.trf.xlu0
    %v322 = vpop.trf.xlu0
    %v323 = vpop.trf.xlu0
    %v324 = vpop.trf.xlu0
    %v325 = vpop.trf.xlu0
    %v326 = vpop.trf.xlu0
    %v327 = vpop.trf.xlu0
    %v328 = vpop.trf.xlu0
    %v329 = vpop.trf.xlu0
    %v330 = vpop.trf.xlu0
    %v331 = vpop.trf.xlu0
    %v332 = vpop.trf.xlu0
    %v333 = vpop.trf.xlu0
    %v334 = vpop.trf.xlu0
    %v335 = vpop.trf.xlu0
    %336 = vxpose.xlu0.b32.start [1/16] %v159, 128
    %337 = vxpose.xlu0.b32.cont [2/16] %v162, 128
    %338 = vxpose.xlu0.b32.cont [3/16] 0.0, 128
    %339 = vxpose.xlu0.b32.cont [4/16] 0.0, 128
    %340 = vxpose.xlu0.b32.cont [5/16] 0.0, 128
    %341 = vxpose.xlu0.b32.cont [6/16] 0.0, 128
    %342 = vxpose.xlu0.b32.cont [7/16] 0.0, 128
    %343 = vxpose.xlu0.b32.cont [8/16] 0.0, 128
    %344 = vxpose.xlu0.b32.cont [9/16] 0.0, 128
    %345 = vxpose.xlu0.b32.cont [10/16] 0.0, 128
    %346 = vxpose.xlu0.b32.cont [11/16] 0.0, 128
    %347 = vxpose.xlu0.b32.cont [12/16] 0.0, 128
    %348 = vxpose.xlu0.b32.cont [13/16] 0.0, 128
    %349 = vxpose.xlu0.b32.cont [14/16] 0.0, 128
    %350 = vxpose.xlu0.b32.cont [15/16] 0.0, 128
    %351 = vxpose.xlu0.b32.end [16/16] 0.0, 128
    %v352 = vpop.trf.xlu0
    %v353 = vpop.trf.xlu0
    %v354 = vpop.trf.xlu0
    %v355 = vpop.trf.xlu0
    %v356 = vpop.trf.xlu0
    %v357 = vpop.trf.xlu0
    %v358 = vpop.trf.xlu0
    %v359 = vpop.trf.xlu0
    %v360 = vpop.trf.xlu0
    %v361 = vpop.trf.xlu0
    %v362 = vpop.trf.xlu0
    %v363 = vpop.trf.xlu0
    %v364 = vpop.trf.xlu0
    %v365 = vpop.trf.xlu0
    %v366 = vpop.trf.xlu0
    %v367 = vpop.trf.xlu0
    %368 = vxpose.xlu0.b32.start [1/16] %v165, 128
    %369 = vxpose.xlu0.b32.cont [2/16] %v168, 128
    %370 = vxpose.xlu0.b32.cont [3/16] 0.0, 128
    %371 = vxpose.xlu0.b32.cont [4/16] 0.0, 128
    %372 = vxpose.xlu0.b32.cont [5/16] 0.0, 128
    %373 = vxpose.xlu0.b32.cont [6/16] 0.0, 128
    %374 = vxpose.xlu0.b32.cont [7/16] 0.0, 128
    %375 = vxpose.xlu0.b32.cont [8/16] 0.0, 128
    %376 = vxpose.xlu0.b32.cont [9/16] 0.0, 128
    %377 = vxpose.xlu0.b32.cont [10/16] 0.0, 128
    %378 = vxpose.xlu0.b32.cont [11/16] 0.0, 128
    %379 = vxpose.xlu0.b32.cont [12/16] 0.0, 128
    %380 = vxpose.xlu0.b32.cont [13/16] 0.0, 128
    %381 = vxpose.xlu0.b32.cont [14/16] 0.0, 128
    %382 = vxpose.xlu0.b32.cont [15/16] 0.0, 128
    %383 = vxpose.xlu0.b32.end [16/16] 0.0, 128
    %v384 = vpop.trf.xlu0
    %v385 = vpop.trf.xlu0
    %v386 = vpop.trf.xlu0
    %v387 = vpop.trf.xlu0
    %v388 = vpop.trf.xlu0
    %v389 = vpop.trf.xlu0
    %v390 = vpop.trf.xlu0
    %v391 = vpop.trf.xlu0
    %v392 = vpop.trf.xlu0
    %v393 = vpop.trf.xlu0
    %v394 = vpop.trf.xlu0
    %v395 = vpop.trf.xlu0
    %v396 = vpop.trf.xlu0
    %v397 = vpop.trf.xlu0
    %v398 = vpop.trf.xlu0
    %v399 = vpop.trf.xlu0
    %400 = vxpose.xlu0.b32.start [1/16] %v171, 128
    %401 = vxpose.xlu0.b32.cont [2/16] %v174, 128
    %402 = vxpose.xlu0.b32.cont [3/16] 0.0, 128
    %403 = vxpose.xlu0.b32.cont [4/16] 0.0, 128
    %404 = vxpose.xlu0.b32.cont [5/16] 0.0, 128
    %405 = vxpose.xlu0.b32.cont [6/16] 0.0, 128
    %406 = vxpose.xlu0.b32.cont [7/16] 0.0, 128
    %407 = vxpose.xlu0.b32.cont [8/16] 0.0, 128
    %408 = vxpose.xlu0.b32.cont [9/16] 0.0, 128
    %409 = vxpose.xlu0.b32.cont [10/16] 0.0, 128
    %410 = vxpose.xlu0.b32.cont [11/16] 0.0, 128
    %411 = vxpose.xlu0.b32.cont [12/16] 0.0, 128
    %412 = vxpose.xlu0.b32.cont [13/16] 0.0, 128
    %413 = vxpose.xlu0.b32.cont [14/16] 0.0, 128
    %414 = vxpose.xlu0.b32.cont [15/16] 0.0, 128
    %415 = vxpose.xlu0.b32.end [16/16] 0.0, 128
    %v416 = vpop.trf.xlu0
    %v417 = vpop.trf.xlu0
    %v418 = vpop.trf.xlu0
    %v419 = vpop.trf.xlu0
    %v420 = vpop.trf.xlu0
    %v421 = vpop.trf.xlu0
    %v422 = vpop.trf.xlu0
    %v423 = vpop.trf.xlu0
    %v424 = vpop.trf.xlu0
    %v425 = vpop.trf.xlu0
    %v426 = vpop.trf.xlu0
    %v427 = vpop.trf.xlu0
    %v428 = vpop.trf.xlu0
    %v429 = vpop.trf.xlu0
    %v430 = vpop.trf.xlu0
    %v431 = vpop.trf.xlu0
    %v433 = vsel %vm62, %v192, 0
    %v436 = vsel %vm62, %v193, 0
    %v439 = vsel %vm62, %v224, 0
    %v442 = vsel %vm62, %v225, 0
    %v445 = vsel %vm62, %v256, 0
    %v448 = vsel %vm62, %v257, 0
    %v451 = vsel %vm62, %v288, 0
    %v454 = vsel %vm62, %v289, 0
    %v457 = vsel %vm62, %v320, 0
    %v460 = vsel %vm62, %v321, 0
    %v463 = vsel %vm62, %v352, 0
    %v466 = vsel %vm62, %v353, 0
    %v469 = vsel %vm62, %v384, 0
    %v472 = vsel %vm62, %v385, 0
    %v475 = vsel %vm62, %v416, 0
    %v478 = vsel %vm62, %v417, 0
    %480 = vmatpush.msra.mxu0 0.0
    %481 = vmatpush.msra.mxu0 0.0
    %482 = vmatpush.msra.mxu0 0.0
    %483 = vmatpush.msra.mxu0 0.0
    %484 = vmatpush.msra.mxu0 0.0
    %485 = vmatpush.msra.mxu0 0.0
    %486 = vmatpush.msra.mxu0 0.0
    %487 = vmatpush.msra.mxu0 0.0
    %488 = vmatpush.msra.mxu0 0.0
    %489 = vmatpush.msra.mxu0 0.0
    %490 = vmatpush.msra.mxu0 0.0
    %491 = vmatpush.msra.mxu0 0.0
    %492 = vmatpush.msra.mxu0 0.0
    %493 = vmatpush.msra.mxu0 0.0
    %494 = vmatpush.msra.mxu0 %v45
    %495 = vmatpush.msra.mxu0 %v44
    %496 = vmatmul.f32.gmra.mxu0 %v433
    %v497 = vpop.f32.mrf.mxu0
    %v498 = vadd.f32 0.0, %v497
    %499 = vmatmul.f32.gmra.mxu0 %v436
    %v500 = vpop.f32.mrf.mxu0
    %v501 = vadd.f32 0.0, %v500
    %502 = vmatmul.f32.gmra.mxu0 %v439
    %v503 = vpop.f32.mrf.mxu0
    %v504 = vadd.f32 0.0, %v503
    %505 = vmatmul.f32.gmra.mxu0 %v442
    %v506 = vpop.f32.mrf.mxu0
    %v507 = vadd.f32 0.0, %v506
    %508 = vmatmul.f32.gmra.mxu0 %v445
    %v509 = vpop.f32.mrf.mxu0
    %v510 = vadd.f32 0.0, %v509
    %511 = vmatmul.f32.gmra.mxu0 %v448
    %v512 = vpop.f32.mrf.mxu0
    %v513 = vadd.f32 0.0, %v512
    %514 = vmatmul.f32.gmra.mxu0 %v451
    %v515 = vpop.f32.mrf.mxu0
    %v516 = vadd.f32 0.0, %v515
    %517 = vmatmul.f32.gmra.mxu0 %v454
    %v518 = vpop.f32.mrf.mxu0
    %v519 = vadd.f32 0.0, %v518
    %520 = vmatmul.f32.gmra.mxu0 %v457
    %v521 = vpop.f32.mrf.mxu0
    %v522 = vadd.f32 0.0, %v521
    %523 = vmatmul.f32.gmra.mxu0 %v460
    %v524 = vpop.f32.mrf.mxu0
    %v525 = vadd.f32 0.0, %v524
    %526 = vmatmul.f32.gmra.mxu0 %v463
    %v527 = vpop.f32.mrf.mxu0
    %v528 = vadd.f32 0.0, %v527
    %529 = vmatmul.f32.gmra.mxu0 %v466
    %v530 = vpop.f32.mrf.mxu0
    %v531 = vadd.f32 0.0, %v530
    %532 = vmatmul.f32.gmra.mxu0 %v469
    %v533 = vpop.f32.mrf.mxu0
    %v534 = vadd.f32 0.0, %v533
    %535 = vmatmul.f32.gmra.mxu0 %v472
    %v536 = vpop.f32.mrf.mxu0
    %v537 = vadd.f32 0.0, %v536
    %538 = vmatmul.f32.gmra.mxu0 %v475
    %v539 = vpop.f32.mrf.mxu0
    %v540 = vadd.f32 0.0, %v539
    %541 = vmatmul.f32.gmra.mxu0 %v478
    %v542 = vpop.f32.mrf.mxu0
    %v543 = vadd.f32 0.0, %v542
    %544 = vdwg.mxu0
    %545 = vxpose.xlu0.b32.start [1/16] %v498, 128
    %546 = vxpose.xlu0.b32.cont [2/16] %v501, 128
    %547 = vxpose.xlu0.b32.cont [3/16] 0.0, 128
    %548 = vxpose.xlu0.b32.cont [4/16] 0.0, 128
    %549 = vxpose.xlu0.b32.cont [5/16] 0.0, 128
    %550 = vxpose.xlu0.b32.cont [6/16] 0.0, 128
    %551 = vxpose.xlu0.b32.cont [7/16] 0.0, 128
    %552 = vxpose.xlu0.b32.cont [8/16] 0.0, 128
    %553 = vxpose.xlu0.b32.cont [9/16] 0.0, 128
    %554 = vxpose.xlu0.b32.cont [10/16] 0.0, 128
    %555 = vxpose.xlu0.b32.cont [11/16] 0.0, 128
    %556 = vxpose.xlu0.b32.cont [12/16] 0.0, 128
    %557 = vxpose.xlu0.b32.cont [13/16] 0.0, 128
    %558 = vxpose.xlu0.b32.cont [14/16] 0.0, 128
    %559 = vxpose.xlu0.b32.cont [15/16] 0.0, 128
    %560 = vxpose.xlu0.b32.end [16/16] 0.0, 128
    %v561 = vpop.trf.xlu0
    %v562 = vpop.trf.xlu0
    %v563 = vpop.trf.xlu0
    %v564 = vpop.trf.xlu0
    %v565 = vpop.trf.xlu0
    %v566 = vpop.trf.xlu0
    %v567 = vpop.trf.xlu0
    %v568 = vpop.trf.xlu0
    %v569 = vpop.trf.xlu0
    %v570 = vpop.trf.xlu0
    %v571 = vpop.trf.xlu0
    %v572 = vpop.trf.xlu0
    %v573 = vpop.trf.xlu0
    %v574 = vpop.trf.xlu0
    %v575 = vpop.trf.xlu0
    %v576 = vpop.trf.xlu0
    %577 = vxpose.xlu0.b32.start [1/16] %v504, 128
    %578 = vxpose.xlu0.b32.cont [2/16] %v507, 128
    %579 = vxpose.xlu0.b32.cont [3/16] 0.0, 128
    %580 = vxpose.xlu0.b32.cont [4/16] 0.0, 128
    %581 = vxpose.xlu0.b32.cont [5/16] 0.0, 128
    %582 = vxpose.xlu0.b32.cont [6/16] 0.0, 128
    %583 = vxpose.xlu0.b32.cont [7/16] 0.0, 128
    %584 = vxpose.xlu0.b32.cont [8/16] 0.0, 128
    %585 = vxpose.xlu0.b32.cont [9/16] 0.0, 128
    %586 = vxpose.xlu0.b32.cont [10/16] 0.0, 128
    %587 = vxpose.xlu0.b32.cont [11/16] 0.0, 128
    %588 = vxpose.xlu0.b32.cont [12/16] 0.0, 128
    %589 = vxpose.xlu0.b32.cont [13/16] 0.0, 128
    %590 = vxpose.xlu0.b32.cont [14/16] 0.0, 128
    %591 = vxpose.xlu0.b32.cont [15/16] 0.0, 128
    %592 = vxpose.xlu0.b32.end [16/16] 0.0, 128
    %v593 = vpop.trf.xlu0
    %v594 = vpop.trf.xlu0
    %v595 = vpop.trf.xlu0
    %v596 = vpop.trf.xlu0
    %v597 = vpop.trf.xlu0
    %v598 = vpop.trf.xlu0
    %v599 = vpop.trf.xlu0
    %v600 = vpop.trf.xlu0
    %v601 = vpop.trf.xlu0
    %v602 = vpop.trf.xlu0
    %v603 = vpop.trf.xlu0
    %v604 = vpop.trf.xlu0
    %v605 = vpop.trf.xlu0
    %v606 = vpop.trf.xlu0
    %v607 = vpop.trf.xlu0
    %v608 = vpop.trf.xlu0
    %609 = vxpose.xlu0.b32.start [1/16] %v510, 128
    %610 = vxpose.xlu0.b32.cont [2/16] %v513, 128
    %611 = vxpose.xlu0.b32.cont [3/16] 0.0, 128
    %612 = vxpose.xlu0.b32.cont [4/16] 0.0, 128
    %613 = vxpose.xlu0.b32.cont [5/16] 0.0, 128
    %614 = vxpose.xlu0.b32.cont [6/16] 0.0, 128
    %615 = vxpose.xlu0.b32.cont [7/16] 0.0, 128
    %616 = vxpose.xlu0.b32.cont [8/16] 0.0, 128
    %617 = vxpose.xlu0.b32.cont [9/16] 0.0, 128
    %618 = vxpose.xlu0.b32.cont [10/16] 0.0, 128
    %619 = vxpose.xlu0.b32.cont [11/16] 0.0, 128
    %620 = vxpose.xlu0.b32.cont [12/16] 0.0, 128
    %621 = vxpose.xlu0.b32.cont [13/16] 0.0, 128
    %622 = vxpose.xlu0.b32.cont [14/16] 0.0, 128
    %623 = vxpose.xlu0.b32.cont [15/16] 0.0, 128
    %624 = vxpose.xlu0.b32.end [16/16] 0.0, 128
    %v625 = vpop.trf.xlu0
    %v626 = vpop.trf.xlu0
    %v627 = vpop.trf.xlu0
    %v628 = vpop.trf.xlu0
    %v629 = vpop.trf.xlu0
    %v630 = vpop.trf.xlu0
    %v631 = vpop.trf.xlu0
    %v632 = vpop.trf.xlu0
    %v633 = vpop.trf.xlu0
    %v634 = vpop.trf.xlu0
    %v635 = vpop.trf.xlu0
    %v636 = vpop.trf.xlu0
    %v637 = vpop.trf.xlu0
    %v638 = vpop.trf.xlu0
    %v639 = vpop.trf.xlu0
    %v640 = vpop.trf.xlu0
    %641 = vxpose.xlu0.b32.start [1/16] %v516, 128
    %642 = vxpose.xlu0.b32.cont [2/16] %v519, 128
    %643 = vxpose.xlu0.b32.cont [3/16] 0.0, 128
    %644 = vxpose.xlu0.b32.cont [4/16] 0.0, 128
    %645 = vxpose.xlu0.b32.cont [5/16] 0.0, 128
    %646 = vxpose.xlu0.b32.cont [6/16] 0.0, 128
    %647 = vxpose.xlu0.b32.cont [7/16] 0.0, 128
    %648 = vxpose.xlu0.b32.cont [8/16] 0.0, 128
    %649 = vxpose.xlu0.b32.cont [9/16] 0.0, 128
    %650 = vxpose.xlu0.b32.cont [10/16] 0.0, 128
    %651 = vxpose.xlu0.b32.cont [11/16] 0.0, 128
    %652 = vxpose.xlu0.b32.cont [12/16] 0.0, 128
    %653 = vxpose.xlu0.b32.cont [13/16] 0.0, 128
    %654 = vxpose.xlu0.b32.cont [14/16] 0.0, 128
    %655 = vxpose.xlu0.b32.cont [15/16] 0.0, 128
    %656 = vxpose.xlu0.b32.end [16/16] 0.0, 128
    %v657 = vpop.trf.xlu0
    %v658 = vpop.trf.xlu0
    %v659 = vpop.trf.xlu0
    %v660 = vpop.trf.xlu0
    %v661 = vpop.trf.xlu0
    %v662 = vpop.trf.xlu0
    %v663 = vpop.trf.xlu0
    %v664 = vpop.trf.xlu0
    %v665 = vpop.trf.xlu0
    %v666 = vpop.trf.xlu0
    %v667 = vpop.trf.xlu0
    %v668 = vpop.trf.xlu0
    %v669 = vpop.trf.xlu0
    %v670 = vpop.trf.xlu0
    %v671 = vpop.trf.xlu0
    %v672 = vpop.trf.xlu0
    %673 = vxpose.xlu0.b32.start [1/16] %v522, 128
    %674 = vxpose.xlu0.b32.cont [2/16] %v525, 128
    %675 = vxpose.xlu0.b32.cont [3/16] 0.0, 128
    %676 = vxpose.xlu0.b32.cont [4/16] 0.0, 128
    %677 = vxpose.xlu0.b32.cont [5/16] 0.0, 128
    %678 = vxpose.xlu0.b32.cont [6/16] 0.0, 128
    %679 = vxpose.xlu0.b32.cont [7/16] 0.0, 128
    %680 = vxpose.xlu0.b32.cont [8/16] 0.0, 128
    %681 = vxpose.xlu0.b32.cont [9/16] 0.0, 128
    %682 = vxpose.xlu0.b32.cont [10/16] 0.0, 128
    %683 = vxpose.xlu0.b32.cont [11/16] 0.0, 128
    %684 = vxpose.xlu0.b32.cont [12/16] 0.0, 128
    %685 = vxpose.xlu0.b32.cont [13/16] 0.0, 128
    %686 = vxpose.xlu0.b32.cont [14/16] 0.0, 128
    %687 = vxpose.xlu0.b32.cont [15/16] 0.0, 128
    %688 = vxpose.xlu0.b32.end [16/16] 0.0, 128
    %v689 = vpop.trf.xlu0
    %v690 = vpop.trf.xlu0
    %v691 = vpop.trf.xlu0
    %v692 = vpop.trf.xlu0
    %v693 = vpop.trf.xlu0
    %v694 = vpop.trf.xlu0
    %v695 = vpop.trf.xlu0
    %v696 = vpop.trf.xlu0
    %v697 = vpop.trf.xlu0
    %v698 = vpop.trf.xlu0
    %v699 = vpop.trf.xlu0
    %v700 = vpop.trf.xlu0
    %v701 = vpop.trf.xlu0
    %v702 = vpop.trf.xlu0
    %v703 = vpop.trf.xlu0
    %v704 = vpop.trf.xlu0
    %705 = vxpose.xlu0.b32.start [1/16] %v528, 128
    %706 = vxpose.xlu0.b32.cont [2/16] %v531, 128
    %707 = vxpose.xlu0.b32.cont [3/16] 0.0, 128
    %708 = vxpose.xlu0.b32.cont [4/16] 0.0, 128
    %709 = vxpose.xlu0.b32.cont [5/16] 0.0, 128
    %710 = vxpose.xlu0.b32.cont [6/16] 0.0, 128
    %711 = vxpose.xlu0.b32.cont [7/16] 0.0, 128
    %712 = vxpose.xlu0.b32.cont [8/16] 0.0, 128
    %713 = vxpose.xlu0.b32.cont [9/16] 0.0, 128
    %714 = vxpose.xlu0.b32.cont [10/16] 0.0, 128
    %715 = vxpose.xlu0.b32.cont [11/16] 0.0, 128
    %716 = vxpose.xlu0.b32.cont [12/16] 0.0, 128
    %717 = vxpose.xlu0.b32.cont [13/16] 0.0, 128
    %718 = vxpose.xlu0.b32.cont [14/16] 0.0, 128
    %719 = vxpose.xlu0.b32.cont [15/16] 0.0, 128
    %720 = vxpose.xlu0.b32.end [16/16] 0.0, 128
    %v721 = vpop.trf.xlu0
    %v722 = vpop.trf.xlu0
    %v723 = vpop.trf.xlu0
    %v724 = vpop.trf.xlu0
    %v725 = vpop.trf.xlu0
    %v726 = vpop.trf.xlu0
    %v727 = vpop.trf.xlu0
    %v728 = vpop.trf.xlu0
    %v729 = vpop.trf.xlu0
    %v730 = vpop.trf.xlu0
    %v731 = vpop.trf.xlu0
    %v732 = vpop.trf.xlu0
    %v733 = vpop.trf.xlu0
    %v734 = vpop.trf.xlu0
    %v735 = vpop.trf.xlu0
    %v736 = vpop.trf.xlu0
    %737 = vxpose.xlu0.b32.start [1/16] %v534, 128
    %738 = vxpose.xlu0.b32.cont [2/16] %v537, 128
    %739 = vxpose.xlu0.b32.cont [3/16] 0.0, 128
    %740 = vxpose.xlu0.b32.cont [4/16] 0.0, 128
    %741 = vxpose.xlu0.b32.cont [5/16] 0.0, 128
    %742 = vxpose.xlu0.b32.cont [6/16] 0.0, 128
    %743 = vxpose.xlu0.b32.cont [7/16] 0.0, 128
    %744 = vxpose.xlu0.b32.cont [8/16] 0.0, 128
    %745 = vxpose.xlu0.b32.cont [9/16] 0.0, 128
    %746 = vxpose.xlu0.b32.cont [10/16] 0.0, 128
    %747 = vxpose.xlu0.b32.cont [11/16] 0.0, 128
    %748 = vxpose.xlu0.b32.cont [12/16] 0.0, 128
    %749 = vxpose.xlu0.b32.cont [13/16] 0.0, 128
    %750 = vxpose.xlu0.b32.cont [14/16] 0.0, 128
    %751 = vxpose.xlu0.b32.cont [15/16] 0.0, 128
    %752 = vxpose.xlu0.b32.end [16/16] 0.0, 128
    %v753 = vpop.trf.xlu0
    %v754 = vpop.trf.xlu0
    %v755 = vpop.trf.xlu0
    %v756 = vpop.trf.xlu0
    %v757 = vpop.trf.xlu0
    %v758 = vpop.trf.xlu0
    %v759 = vpop.trf.xlu0
    %v760 = vpop.trf.xlu0
    %v761 = vpop.trf.xlu0
    %v762 = vpop.trf.xlu0
    %v763 = vpop.trf.xlu0
    %v764 = vpop.trf.xlu0
    %v765 = vpop.trf.xlu0
    %v766 = vpop.trf.xlu0
    %v767 = vpop.trf.xlu0
    %v768 = vpop.trf.xlu0
    %769 = vxpose.xlu0.b32.start [1/16] %v540, 128
    %770 = vxpose.xlu0.b32.cont [2/16] %v543, 128
    %771 = vxpose.xlu0.b32.cont [3/16] 0.0, 128
    %772 = vxpose.xlu0.b32.cont [4/16] 0.0, 128
    %773 = vxpose.xlu0.b32.cont [5/16] 0.0, 128
    %774 = vxpose.xlu0.b32.cont [6/16] 0.0, 128
    %775 = vxpose.xlu0.b32.cont [7/16] 0.0, 128
    %776 = vxpose.xlu0.b32.cont [8/16] 0.0, 128
    %777 = vxpose.xlu0.b32.cont [9/16] 0.0, 128
    %778 = vxpose.xlu0.b32.cont [10/16] 0.0, 128
    %779 = vxpose.xlu0.b32.cont [11/16] 0.0, 128
    %780 = vxpose.xlu0.b32.cont [12/16] 0.0, 128
    %781 = vxpose.xlu0.b32.cont [13/16] 0.0, 128
    %782 = vxpose.xlu0.b32.cont [14/16] 0.0, 128
    %783 = vxpose.xlu0.b32.cont [15/16] 0.0, 128
    %784 = vxpose.xlu0.b32.end [16/16] 0.0, 128
    %v785 = vpop.trf.xlu0
    %v786 = vpop.trf.xlu0
    %v787 = vpop.trf.xlu0
    %v788 = vpop.trf.xlu0
    %v789 = vpop.trf.xlu0
    %v790 = vpop.trf.xlu0
    %v791 = vpop.trf.xlu0
    %v792 = vpop.trf.xlu0
    %v793 = vpop.trf.xlu0
    %v794 = vpop.trf.xlu0
    %v795 = vpop.trf.xlu0
    %v796 = vpop.trf.xlu0
    %v797 = vpop.trf.xlu0
    %v798 = vpop.trf.xlu0
    %v799 = vpop.trf.xlu0
    %v800 = vpop.trf.xlu0
    %801 = vst.msk [vmem:[#allocation7] sm:$0xff] %vm62, %v561
    %802 = vst.msk [vmem:[#allocation7 + $0x8] sm:$0xff] %vm62, %v562
    %803 = vst.msk [vmem:[#allocation7 + $0x10] sm:$0xff] %vm62, %v593
    %804 = vst.msk [vmem:[#allocation7 + $0x18] sm:$0xff] %vm62, %v594
    %805 = vst.msk [vmem:[#allocation7 + $0x20] sm:$0xff] %vm62, %v625
    %806 = vst.msk [vmem:[#allocation7 + $0x28] sm:$0xff] %vm62, %v626
    %807 = vst.msk [vmem:[#allocation7 + $0x30] sm:$0xff] %vm62, %v657
    %808 = vst.msk [vmem:[#allocation7 + $0x38] sm:$0xff] %vm62, %v658
    %809 = vst.msk [vmem:[#allocation7 + $0x40] sm:$0xff] %vm62, %v689
    %810 = vst.msk [vmem:[#allocation7 + $0x48] sm:$0xff] %vm62, %v690
    %811 = vst.msk [vmem:[#allocation7 + $0x50] sm:$0xff] %vm62, %v721
    %812 = vst.msk [vmem:[#allocation7 + $0x58] sm:$0xff] %vm62, %v722
    %813 = vst.msk [vmem:[#allocation7 + $0x60] sm:$0xff] %vm62, %v753
    %814 = vst.msk [vmem:[#allocation7 + $0x68] sm:$0xff] %vm62, %v754
    %815 = vst.msk [vmem:[#allocation7 + $0x70] sm:$0xff] %vm62, %v785
    %816 = vst.msk [vmem:[#allocation7 + $0x78] sm:$0xff] %vm62, %v786
    // Predicated region
    $region18: #{tpu_custom_call.1} parent=1 // pred_check
      _
    $region19: #{tpu_custom_call.1} parent=1 // pred_check_branch
      %818 = sbr.rel (0) target = $region21
    $region20: #{tpu_custom_call.1} parent=1 // pred_region
      %820 = vsyncadd [#allocation4], 0
      %s821 = sshll.u32 [#allocation7], 4
      %s822 = int_to_ptr.vmem [resolvable:$true] %s821
      %s823 = sshll.u32 %s2, 4
      %s824 = int_to_ptr.hbm [resolvable:$true] %s823
      %829 = dma.vmem_to_hbm [thread:$0]  %s822, 2048, %s824, [#allocation4], 128, 128, 8
    $region21: #{tpu_custom_call.1} parent=1 // pred_fallthru
      _
    // Predicated region
    $region22: #{tpu_custom_call.1} parent=1 // pred_check
      _
    $region23: #{tpu_custom_call.1} parent=1 // pred_check_branch
      %831 = sbr.rel (0) target = $region25
    $region24: #{tpu_custom_call.1} parent=1 // pred_region
      %833 = dma.done [#allocation4], 2048
    $region25: #{tpu_custom_call.1} parent=1 // pred_fallthru
      _
    %834 = vsyncpa [#allocation3], 1
    %835 = vsyncpa [#allocation6], 1
    %836 = vsyncpa [#allocation4], 1

// kernel: tpu_custom_call.1
$region0: #{tpu_custom_call.1}
  #allocation0 [shape = 'u32[]', space=smem, size = 0x4, offset = 0x4, fixed_abs, tag = 'smem constant byte address 0x4 - core index']
  #allocation1 [shape = 'u32[72,128]{1,0:T(1,128)}', space=vmem, size = 0x9000, scoped, tag = 'internal scratch']
  %s0 = inlined_call_operand.hbm [shape: f32[8,16,16], index: 0, kind: input, shape index: {}]
  %s1 = inlined_call_operand.hbm [shape: f32[16,16], index: 1, kind: input, shape index: {}]
  %s2 = inlined_call_operand.hbm [shape: f32[8,16,16], index: 2, kind: output, shape index: {}]
  %s3 = sld [smem:[#allocation0]]
  $region26: #{tpu_custom_call.1} parent=0
    _
  %s5 = ssub.s32 1, %s3
  %s6 = scalar_select 0, %s5, %s3
  $region1: #{tpu_custom_call.1} parent=0
    #allocation2 [shape = 'u8[65536]{0}', space=vmem, size = 0x10000, scoped, tag = 'input window, operand 0, single buffered']
    #allocation3 [shape = 's32[1]{0}', space=sflag, size = 0x4, scoped, tag = 'scoped memory for tpu_custom_call.1']
    #allocation4 [shape = 's32[1]{0}', space=sflag, size = 0x4, scoped, tag = 'scoped memory for tpu_custom_call.1']
    #allocation5 [shape = 'u8[8192]{0}', space=vmem, size = 0x2000, scoped, tag = 'input window, operand 1, single buffered']
    #allocation6 [shape = 's32[1]{0}', space=sflag, size = 0x4, scoped, tag = 'scoped memory for tpu_custom_call.1']
    #allocation7 [shape = 'u8[65536]{0}', space=vmem, size = 0x10000, scoped, tag = 'output window, operand 0, single buffered']
    %7 = vsyncpa [#allocation3], 0
    %8 = vsyncpa [#allocation6], 0
    %9 = vsyncpa [#allocation4], 0
    // Predicated region
    $region2: #{tpu_custom_call.1} parent=1 // pred_check
      _
    $region3: #{tpu_custom_call.1} parent=1 // pred_check_branch
      %11 = sbr.rel (0) target = $region5
    $region4: #{tpu_custom_call.1} parent=1 // pred_region
      %13 = vsyncadd [#allocation3], 0
      %s14 = sshll.u32 %s0, 4
      %s15 = int_to_ptr.hbm [resolvable:$true] %s14
      %s16 = sshll.u32 [#allocation2], 4
      %s17 = int_to_ptr.vmem [resolvable:$true] %s16
      %22 = dma.hbm_to_vmem [thread:$0]  %s15, 2048, %s17, [#allocation3], 128, 128, 8
    $region5: #{tpu_custom_call.1} parent=1 // pred_fallthru
      _
    // Predicated region
    $region6: #{tpu_custom_call.1} parent=1 // pred_check
      _
    $region7: #{tpu_custom_call.1} parent=1 // pred_check_branch
      %24 = sbr.rel (0) target = $region9
    $region8: #{tpu_custom_call.1} parent=1 // pred_region
      %26 = vsyncadd [#allocation6], 0
      %s27 = sshll.u32 %s1, 4
      %s28 = int_to_ptr.hbm [resolvable:$true] %s27
      %s29 = sshll.u32 [#allocation5], 4
      %s30 = int_to_ptr.vmem [resolvable:$true] %s29
      %35 = dma.hbm_to_vmem [thread:$0]  %s28, 256, %s30, [#allocation6], 128, 128, 8
    $region9: #{tpu_custom_call.1} parent=1 // pred_fallthru
      _
    // Predicated region
    $region10: #{tpu_custom_call.1} parent=1 // pred_check
      _
    $region11: #{tpu_custom_call.1} parent=1 // pred_check_branch
      %37 = sbr.rel (0) target = $region13
    $region12: #{tpu_custom_call.1} parent=1 // pred_region
      %39 = dma.done [#allocation3], 2048
    $region13: #{tpu_custom_call.1} parent=1 // pred_fallthru
      _
    // Predicated region
    $region14: #{tpu_custom_call.1} parent=1 // pred_check
      _
    $region15: #{tpu_custom_call.1} parent=1 // pred_check_branch
      %41 = sbr.rel (0) target = $region17
    $region16: #{tpu_custom_call.1} parent=1 // pred_region
      %43 = dma.done [#allocation6], 256
    $region17: #{tpu_custom_call.1} parent=1 // pred_fallthru
      _
    %v44 = vld [vmem:[#allocation5] sm:$0xff]
    %v45 = vld [vmem:[#allocation5 + $0x8] sm:$0xff]
    %v46 = vld [vmem:[#allocation2] sm:$0xff]
    %v47 = vld [vmem:[#allocation2 + $0x8] sm:$0xff]
    %v48 = vld [vmem:[#allocation2 + $0x10] sm:$0xff]
    %v49 = vld [vmem:[#allocation2 + $0x18] sm:$0xff]
    %v50 = vld [vmem:[#allocation2 + $0x20] sm:$0xff]
    %v51 = vld [vmem:[#allocation2 + $0x28] sm:$0xff]
    %v52 = vld [vmem:[#allocation2 + $0x30] sm:$0xff]
    %v53 = vld [vmem:[#allocation2 + $0x38] sm:$0xff]
    %v54 = vld [vmem:[#allocation2 + $0x40] sm:$0xff]
    %v55 = vld [vmem:[#allocation2 + $0x48] sm:$0xff]
    %v56 = vld [vmem:[#allocation2 + $0x50] sm:$0xff]
    %v57 = vld [vmem:[#allocation2 + $0x58] sm:$0xff]
    %v58 = vld [vmem:[#allocation2 + $0x60] sm:$0xff]
    %v59 = vld [vmem:[#allocation2 + $0x68] sm:$0xff]
    %v60 = vld [vmem:[#allocation2 + $0x70] sm:$0xff]
    %v61 = vld [vmem:[#allocation2 + $0x78] sm:$0xff]
    %62 = vxpose.xlu0.b32.start [1/16] %v44, 128
    %63 = vxpose.xlu0.b32.cont [2/16] %v45, 128
    %64 = vxpose.xlu0.b32.cont [3/16] 0.0, 128
    %65 = vxpose.xlu0.b32.cont [4/16] 0.0, 128
    %66 = vxpose.xlu0.b32.cont [5/16] 0.0, 128
    %67 = vxpose.xlu0.b32.cont [6/16] 0.0, 128
    %68 = vxpose.xlu0.b32.cont [7/16] 0.0, 128
    %69 = vxpose.xlu0.b32.cont [8/16] 0.0, 128
    %70 = vxpose.xlu0.b32.cont [9/16] 0.0, 128
    %71 = vxpose.xlu0.b32.cont [10/16] 0.0, 128
    %72 = vxpose.xlu0.b32.cont [11/16] 0.0, 128
    %73 = vxpose.xlu0.b32.cont [12/16] 0.0, 128
    %74 = vxpose.xlu0.b32.cont [13/16] 0.0, 128
    %75 = vxpose.xlu0.b32.cont [14/16] 0.0, 128
    %76 = vxpose.xlu0.b32.cont [15/16] 0.0, 128
    %77 = vxpose.xlu0.b32.end [16/16] 0.0, 128
    %v78 = vpop.trf.xlu0
    %v79 = vpop.trf.xlu0
    %v80 = vpop.trf.xlu0
    %v81 = vpop.trf.xlu0
    %v82 = vpop.trf.xlu0
    %v83 = vpop.trf.xlu0
    %v84 = vpop.trf.xlu0
    %v85 = vpop.trf.xlu0
    %v86 = vpop.trf.xlu0
    %v87 = vpop.trf.xlu0
    %v88 = vpop.trf.xlu0
    %v89 = vpop.trf.xlu0
    %v90 = vpop.trf.xlu0
    %v91 = vpop.trf.xlu0
    %v92 = vpop.trf.xlu0
    %v93 = vpop.trf.xlu0
    %vm94 = vcmask 130048
    %v96 = vsel %vm94, %v46, 0
    %v99 = vsel %vm94, %v47, 0
    %101 = vmatpush.msra.mxu0 0.0
    %102 = vmatpush.msra.mxu0 0.0
    %103 = vmatpush.msra.mxu0 0.0
    %104 = vmatpush.msra.mxu0 0.0
    %105 = vmatpush.msra.mxu0 0.0
    %106 = vmatpush.msra.mxu0 0.0
    %107 = vmatpush.msra.mxu0 0.0
    %108 = vmatpush.msra.mxu0 0.0
    %109 = vmatpush.msra.mxu0 0.0
    %110 = vmatpush.msra.mxu0 0.0
    %111 = vmatpush.msra.mxu0 0.0
    %112 = vmatpush.msra.mxu0 0.0
    %113 = vmatpush.msra.mxu0 0.0
    %114 = vmatpush.msra.mxu0 0.0
    %115 = vmatpush.msra.mxu0 %v45
    %116 = vmatpush.msra.mxu0 %v44
    %117 = vmatmul.f32.gmra.mxu0 %v96
    %v118 = vpop.f32.mrf.mxu0
    %v119 = vadd.f32 0.0, %v118
    %120 = vmatmul.f32.gmra.mxu0 %v99
    %v121 = vpop.f32.mrf.mxu0
    %v122 = vadd.f32 0.0, %v121
    %123 = vdwg.mxu0
    %v125 = vsel %vm94, %v48, 0
    %v128 = vsel %vm94, %v49, 0
    %130 = vmatpush.msra.mxu0 0.0
    %131 = vmatpush.msra.mxu0 0.0
    %132 = vmatpush.msra.mxu0 0.0
    %133 = vmatpush.msra.mxu0 0.0
    %134 = vmatpush.msra.mxu0 0.0
    %135 = vmatpush.msra.mxu0 0.0
    %136 = vmatpush.msra.mxu0 0.0
    %137 = vmatpush.msra.mxu0 0.0
    %138 = vmatpush.msra.mxu0 0.0
    %139 = vmatpush.msra.mxu0 0.0
    %140 = vmatpush.msra.mxu0 0.0
    %141 = vmatpush.msra.mxu0 0.0
    %142 = vmatpush.msra.mxu0 0.0
    %143 = vmatpush.msra.mxu0 0.0
    %144 = vmatpush.msra.mxu0 %v45
    %145 = vmatpush.msra.mxu0 %v44
    %146 = vmatmul.f32.gmra.mxu0 %v125
    %v147 = vpop.f32.mrf.mxu0
    %v148 = vadd.f32 0.0, %v147
    %149 = vmatmul.f32.gmra.mxu0 %v128
    %v150 = vpop.f32.mrf.mxu0
    %v151 = vadd.f32 0.0, %v150
    %152 = vdwg.mxu0
    %v154 = vsel %vm94, %v50, 0
    %v157 = vsel %vm94, %v51, 0
    %159 = vmatpush.msra.mxu0 0.0
    %160 = vmatpush.msra.mxu0 0.0
    %161 = vmatpush.msra.mxu0 0.0
    %162 = vmatpush.msra.mxu0 0.0
    %163 = vmatpush.msra.mxu0 0.0
    %164 = vmatpush.msra.mxu0 0.0
    %165 = vmatpush.msra.mxu0 0.0
    %166 = vmatpush.msra.mxu0 0.0
    %167 = vmatpush.msra.mxu0 0.0
    %168 = vmatpush.msra.mxu0 0.0
    %169 = vmatpush.msra.mxu0 0.0
    %170 = vmatpush.msra.mxu0 0.0
    %171 = vmatpush.msra.mxu0 0.0
    %172 = vmatpush.msra.mxu0 0.0
    %173 = vmatpush.msra.mxu0 %v45
    %174 = vmatpush.msra.mxu0 %v44
    %175 = vmatmul.f32.gmra.mxu0 %v154
    %v176 = vpop.f32.mrf.mxu0
    %v177 = vadd.f32 0.0, %v176
    %178 = vmatmul.f32.gmra.mxu0 %v157
    %v179 = vpop.f32.mrf.mxu0
    %v180 = vadd.f32 0.0, %v179
    %181 = vdwg.mxu0
    %v183 = vsel %vm94, %v52, 0
    %v186 = vsel %vm94, %v53, 0
    %188 = vmatpush.msra.mxu0 0.0
    %189 = vmatpush.msra.mxu0 0.0
    %190 = vmatpush.msra.mxu0 0.0
    %191 = vmatpush.msra.mxu0 0.0
    %192 = vmatpush.msra.mxu0 0.0
    %193 = vmatpush.msra.mxu0 0.0
    %194 = vmatpush.msra.mxu0 0.0
    %195 = vmatpush.msra.mxu0 0.0
    %196 = vmatpush.msra.mxu0 0.0
    %197 = vmatpush.msra.mxu0 0.0
    %198 = vmatpush.msra.mxu0 0.0
    %199 = vmatpush.msra.mxu0 0.0
    %200 = vmatpush.msra.mxu0 0.0
    %201 = vmatpush.msra.mxu0 0.0
    %202 = vmatpush.msra.mxu0 %v45
    %203 = vmatpush.msra.mxu0 %v44
    %204 = vmatmul.f32.gmra.mxu0 %v183
    %v205 = vpop.f32.mrf.mxu0
    %v206 = vadd.f32 0.0, %v205
    %207 = vmatmul.f32.gmra.mxu0 %v186
    %v208 = vpop.f32.mrf.mxu0
    %v209 = vadd.f32 0.0, %v208
    %210 = vdwg.mxu0
    %v212 = vsel %vm94, %v54, 0
    %v215 = vsel %vm94, %v55, 0
    %217 = vmatpush.msra.mxu0 0.0
    %218 = vmatpush.msra.mxu0 0.0
    %219 = vmatpush.msra.mxu0 0.0
    %220 = vmatpush.msra.mxu0 0.0
    %221 = vmatpush.msra.mxu0 0.0
    %222 = vmatpush.msra.mxu0 0.0
    %223 = vmatpush.msra.mxu0 0.0
    %224 = vmatpush.msra.mxu0 0.0
    %225 = vmatpush.msra.mxu0 0.0
    %226 = vmatpush.msra.mxu0 0.0
    %227 = vmatpush.msra.mxu0 0.0
    %228 = vmatpush.msra.mxu0 0.0
    %229 = vmatpush.msra.mxu0 0.0
    %230 = vmatpush.msra.mxu0 0.0
    %231 = vmatpush.msra.mxu0 %v45
    %232 = vmatpush.msra.mxu0 %v44
    %233 = vmatmul.f32.gmra.mxu0 %v212
    %v234 = vpop.f32.mrf.mxu0
    %v235 = vadd.f32 0.0, %v234
    %236 = vmatmul.f32.gmra.mxu0 %v215
    %v237 = vpop.f32.mrf.mxu0
    %v238 = vadd.f32 0.0, %v237
    %239 = vdwg.mxu0
    %v241 = vsel %vm94, %v56, 0
    %v244 = vsel %vm94, %v57, 0
    %246 = vmatpush.msra.mxu0 0.0
    %247 = vmatpush.msra.mxu0 0.0
    %248 = vmatpush.msra.mxu0 0.0
    %249 = vmatpush.msra.mxu0 0.0
    %250 = vmatpush.msra.mxu0 0.0
    %251 = vmatpush.msra.mxu0 0.0
    %252 = vmatpush.msra.mxu0 0.0
    %253 = vmatpush.msra.mxu0 0.0
    %254 = vmatpush.msra.mxu0 0.0
    %255 = vmatpush.msra.mxu0 0.0
    %256 = vmatpush.msra.mxu0 0.0
    %257 = vmatpush.msra.mxu0 0.0
    %258 = vmatpush.msra.mxu0 0.0
    %259 = vmatpush.msra.mxu0 0.0
    %260 = vmatpush.msra.mxu0 %v45
    %261 = vmatpush.msra.mxu0 %v44
    %262 = vmatmul.f32.gmra.mxu0 %v241
    %v263 = vpop.f32.mrf.mxu0
    %v264 = vadd.f32 0.0, %v263
    %265 = vmatmul.f32.gmra.mxu0 %v244
    %v266 = vpop.f32.mrf.mxu0
    %v267 = vadd.f32 0.0, %v266
    %268 = vdwg.mxu0
    %v270 = vsel %vm94, %v58, 0
    %v273 = vsel %vm94, %v59, 0
    %275 = vmatpush.msra.mxu0 0.0
    %276 = vmatpush.msra.mxu0 0.0
    %277 = vmatpush.msra.mxu0 0.0
    %278 = vmatpush.msra.mxu0 0.0
    %279 = vmatpush.msra.mxu0 0.0
    %280 = vmatpush.msra.mxu0 0.0
    %281 = vmatpush.msra.mxu0 0.0
    %282 = vmatpush.msra.mxu0 0.0
    %283 = vmatpush.msra.mxu0 0.0
    %284 = vmatpush.msra.mxu0 0.0
    %285 = vmatpush.msra.mxu0 0.0
    %286 = vmatpush.msra.mxu0 0.0
    %287 = vmatpush.msra.mxu0 0.0
    %288 = vmatpush.msra.mxu0 0.0
    %289 = vmatpush.msra.mxu0 %v45
    %290 = vmatpush.msra.mxu0 %v44
    %291 = vmatmul.f32.gmra.mxu0 %v270
    %v292 = vpop.f32.mrf.mxu0
    %v293 = vadd.f32 0.0, %v292
    %294 = vmatmul.f32.gmra.mxu0 %v273
    %v295 = vpop.f32.mrf.mxu0
    %v296 = vadd.f32 0.0, %v295
    %297 = vdwg.mxu0
    %v299 = vsel %vm94, %v60, 0
    %v302 = vsel %vm94, %v61, 0
    %304 = vmatpush.msra.mxu0 0.0
    %305 = vmatpush.msra.mxu0 0.0
    %306 = vmatpush.msra.mxu0 0.0
    %307 = vmatpush.msra.mxu0 0.0
    %308 = vmatpush.msra.mxu0 0.0
    %309 = vmatpush.msra.mxu0 0.0
    %310 = vmatpush.msra.mxu0 0.0
    %311 = vmatpush.msra.mxu0 0.0
    %312 = vmatpush.msra.mxu0 0.0
    %313 = vmatpush.msra.mxu0 0.0
    %314 = vmatpush.msra.mxu0 0.0
    %315 = vmatpush.msra.mxu0 0.0
    %316 = vmatpush.msra.mxu0 0.0
    %317 = vmatpush.msra.mxu0 0.0
    %318 = vmatpush.msra.mxu0 %v45
    %319 = vmatpush.msra.mxu0 %v44
    %320 = vmatmul.f32.gmra.mxu0 %v299
    %v321 = vpop.f32.mrf.mxu0
    %v322 = vadd.f32 0.0, %v321
    %323 = vmatmul.f32.gmra.mxu0 %v302
    %v324 = vpop.f32.mrf.mxu0
    %v325 = vadd.f32 0.0, %v324
    %326 = vdwg.mxu0
    %v328 = vsel %vm94, %v78, 0
    %v331 = vsel %vm94, %v79, 0
    %333 = vmatpush.msra.mxu0 0.0
    %334 = vmatpush.msra.mxu0 0.0
    %335 = vmatpush.msra.mxu0 0.0
    %336 = vmatpush.msra.mxu0 0.0
    %337 = vmatpush.msra.mxu0 0.0
    %338 = vmatpush.msra.mxu0 0.0
    %339 = vmatpush.msra.mxu0 0.0
    %340 = vmatpush.msra.mxu0 0.0
    %341 = vmatpush.msra.mxu0 0.0
    %342 = vmatpush.msra.mxu0 0.0
    %343 = vmatpush.msra.mxu0 0.0
    %344 = vmatpush.msra.mxu0 0.0
    %345 = vmatpush.msra.mxu0 0.0
    %346 = vmatpush.msra.mxu0 0.0
    %347 = vmatpush.msra.mxu0 %v122
    %348 = vmatpush.msra.mxu0 %v119
    %349 = vmatmul.f32.gmra.mxu0 %v328
    %v350 = vpop.f32.mrf.mxu0
    %v351 = vadd.f32 0.0, %v350
    %352 = vmatmul.f32.gmra.mxu0 %v331
    %v353 = vpop.f32.mrf.mxu0
    %v354 = vadd.f32 0.0, %v353
    %355 = vdwg.mxu0
    %356 = vmatpush.msra.mxu0 0.0
    %357 = vmatpush.msra.mxu0 0.0
    %358 = vmatpush.msra.mxu0 0.0
    %359 = vmatpush.msra.mxu0 0.0
    %360 = vmatpush.msra.mxu0 0.0
    %361 = vmatpush.msra.mxu0 0.0
    %362 = vmatpush.msra.mxu0 0.0
    %363 = vmatpush.msra.mxu0 0.0
    %364 = vmatpush.msra.mxu0 0.0
    %365 = vmatpush.msra.mxu0 0.0
    %366 = vmatpush.msra.mxu0 0.0
    %367 = vmatpush.msra.mxu0 0.0
    %368 = vmatpush.msra.mxu0 0.0
    %369 = vmatpush.msra.mxu0 0.0
    %370 = vmatpush.msra.mxu0 %v151
    %371 = vmatpush.msra.mxu0 %v148
    %372 = vmatmul.f32.gmra.mxu0 %v328
    %v373 = vpop.f32.mrf.mxu0
    %v374 = vadd.f32 0.0, %v373
    %375 = vmatmul.f32.gmra.mxu0 %v331
    %v376 = vpop.f32.mrf.mxu0
    %v377 = vadd.f32 0.0, %v376
    %378 = vdwg.mxu0
    %379 = vmatpush.msra.mxu0 0.0
    %380 = vmatpush.msra.mxu0 0.0
    %381 = vmatpush.msra.mxu0 0.0
    %382 = vmatpush.msra.mxu0 0.0
    %383 = vmatpush.msra.mxu0 0.0
    %384 = vmatpush.msra.mxu0 0.0
    %385 = vmatpush.msra.mxu0 0.0
    %386 = vmatpush.msra.mxu0 0.0
    %387 = vmatpush.msra.mxu0 0.0
    %388 = vmatpush.msra.mxu0 0.0
    %389 = vmatpush.msra.mxu0 0.0
    %390 = vmatpush.msra.mxu0 0.0
    %391 = vmatpush.msra.mxu0 0.0
    %392 = vmatpush.msra.mxu0 0.0
    %393 = vmatpush.msra.mxu0 %v180
    %394 = vmatpush.msra.mxu0 %v177
    %395 = vmatmul.f32.gmra.mxu0 %v328
    %v396 = vpop.f32.mrf.mxu0
    %v397 = vadd.f32 0.0, %v396
    %398 = vmatmul.f32.gmra.mxu0 %v331
    %v399 = vpop.f32.mrf.mxu0
    %v400 = vadd.f32 0.0, %v399
    %401 = vdwg.mxu0
    %402 = vmatpush.msra.mxu0 0.0
    %403 = vmatpush.msra.mxu0 0.0
    %404 = vmatpush.msra.mxu0 0.0
    %405 = vmatpush.msra.mxu0 0.0
    %406 = vmatpush.msra.mxu0 0.0
    %407 = vmatpush.msra.mxu0 0.0
    %408 = vmatpush.msra.mxu0 0.0
    %409 = vmatpush.msra.mxu0 0.0
    %410 = vmatpush.msra.mxu0 0.0
    %411 = vmatpush.msra.mxu0 0.0
    %412 = vmatpush.msra.mxu0 0.0
    %413 = vmatpush.msra.mxu0 0.0
    %414 = vmatpush.msra.mxu0 0.0
    %415 = vmatpush.msra.mxu0 0.0
    %416 = vmatpush.msra.mxu0 %v209
    %417 = vmatpush.msra.mxu0 %v206
    %418 = vmatmul.f32.gmra.mxu0 %v328
    %v419 = vpop.f32.mrf.mxu0
    %v420 = vadd.f32 0.0, %v419
    %421 = vmatmul.f32.gmra.mxu0 %v331
    %v422 = vpop.f32.mrf.mxu0
    %v423 = vadd.f32 0.0, %v422
    %424 = vdwg.mxu0
    %425 = vmatpush.msra.mxu0 0.0
    %426 = vmatpush.msra.mxu0 0.0
    %427 = vmatpush.msra.mxu0 0.0
    %428 = vmatpush.msra.mxu0 0.0
    %429 = vmatpush.msra.mxu0 0.0
    %430 = vmatpush.msra.mxu0 0.0
    %431 = vmatpush.msra.mxu0 0.0
    %432 = vmatpush.msra.mxu0 0.0
    %433 = vmatpush.msra.mxu0 0.0
    %434 = vmatpush.msra.mxu0 0.0
    %435 = vmatpush.msra.mxu0 0.0
    %436 = vmatpush.msra.mxu0 0.0
    %437 = vmatpush.msra.mxu0 0.0
    %438 = vmatpush.msra.mxu0 0.0
    %439 = vmatpush.msra.mxu0 %v238
    %440 = vmatpush.msra.mxu0 %v235
    %441 = vmatmul.f32.gmra.mxu0 %v328
    %v442 = vpop.f32.mrf.mxu0
    %v443 = vadd.f32 0.0, %v442
    %444 = vmatmul.f32.gmra.mxu0 %v331
    %v445 = vpop.f32.mrf.mxu0
    %v446 = vadd.f32 0.0, %v445
    %447 = vdwg.mxu0
    %448 = vmatpush.msra.mxu0 0.0
    %449 = vmatpush.msra.mxu0 0.0
    %450 = vmatpush.msra.mxu0 0.0
    %451 = vmatpush.msra.mxu0 0.0
    %452 = vmatpush.msra.mxu0 0.0
    %453 = vmatpush.msra.mxu0 0.0
    %454 = vmatpush.msra.mxu0 0.0
    %455 = vmatpush.msra.mxu0 0.0
    %456 = vmatpush.msra.mxu0 0.0
    %457 = vmatpush.msra.mxu0 0.0
    %458 = vmatpush.msra.mxu0 0.0
    %459 = vmatpush.msra.mxu0 0.0
    %460 = vmatpush.msra.mxu0 0.0
    %461 = vmatpush.msra.mxu0 0.0
    %462 = vmatpush.msra.mxu0 %v267
    %463 = vmatpush.msra.mxu0 %v264
    %464 = vmatmul.f32.gmra.mxu0 %v328
    %v465 = vpop.f32.mrf.mxu0
    %v466 = vadd.f32 0.0, %v465
    %467 = vmatmul.f32.gmra.mxu0 %v331
    %v468 = vpop.f32.mrf.mxu0
    %v469 = vadd.f32 0.0, %v468
    %470 = vdwg.mxu0
    %471 = vmatpush.msra.mxu0 0.0
    %472 = vmatpush.msra.mxu0 0.0
    %473 = vmatpush.msra.mxu0 0.0
    %474 = vmatpush.msra.mxu0 0.0
    %475 = vmatpush.msra.mxu0 0.0
    %476 = vmatpush.msra.mxu0 0.0
    %477 = vmatpush.msra.mxu0 0.0
    %478 = vmatpush.msra.mxu0 0.0
    %479 = vmatpush.msra.mxu0 0.0
    %480 = vmatpush.msra.mxu0 0.0
    %481 = vmatpush.msra.mxu0 0.0
    %482 = vmatpush.msra.mxu0 0.0
    %483 = vmatpush.msra.mxu0 0.0
    %484 = vmatpush.msra.mxu0 0.0
    %485 = vmatpush.msra.mxu0 %v296
    %486 = vmatpush.msra.mxu0 %v293
    %487 = vmatmul.f32.gmra.mxu0 %v328
    %v488 = vpop.f32.mrf.mxu0
    %v489 = vadd.f32 0.0, %v488
    %490 = vmatmul.f32.gmra.mxu0 %v331
    %v491 = vpop.f32.mrf.mxu0
    %v492 = vadd.f32 0.0, %v491
    %493 = vdwg.mxu0
    %494 = vmatpush.msra.mxu0 0.0
    %495 = vmatpush.msra.mxu0 0.0
    %496 = vmatpush.msra.mxu0 0.0
    %497 = vmatpush.msra.mxu0 0.0
    %498 = vmatpush.msra.mxu0 0.0
    %499 = vmatpush.msra.mxu0 0.0
    %500 = vmatpush.msra.mxu0 0.0
    %501 = vmatpush.msra.mxu0 0.0
    %502 = vmatpush.msra.mxu0 0.0
    %503 = vmatpush.msra.mxu0 0.0
    %504 = vmatpush.msra.mxu0 0.0
    %505 = vmatpush.msra.mxu0 0.0
    %506 = vmatpush.msra.mxu0 0.0
    %507 = vmatpush.msra.mxu0 0.0
    %508 = vmatpush.msra.mxu0 %v325
    %509 = vmatpush.msra.mxu0 %v322
    %510 = vmatmul.f32.gmra.mxu0 %v328
    %v511 = vpop.f32.mrf.mxu0
    %v512 = vadd.f32 0.0, %v511
    %513 = vmatmul.f32.gmra.mxu0 %v331
    %v514 = vpop.f32.mrf.mxu0
    %v515 = vadd.f32 0.0, %v514
    %516 = vdwg.mxu0
    %517 = vst.msk [vmem:[#allocation7] sm:$0xff] %vm94, %v351
    %518 = vst.msk [vmem:[#allocation7 + $0x8] sm:$0xff] %vm94, %v354
    %519 = vst.msk [vmem:[#allocation7 + $0x10] sm:$0xff] %vm94, %v374
    %520 = vst.msk [vmem:[#allocation7 + $0x18] sm:$0xff] %vm94, %v377
    %521 = vst.msk [vmem:[#allocation7 + $0x20] sm:$0xff] %vm94, %v397
    %522 = vst.msk [vmem:[#allocation7 + $0x28] sm:$0xff] %vm94, %v400
    %523 = vst.msk [vmem:[#allocation7 + $0x30] sm:$0xff] %vm94, %v420
    %524 = vst.msk [vmem:[#allocation7 + $0x38] sm:$0xff] %vm94, %v423
    %525 = vst.msk [vmem:[#allocation7 + $0x40] sm:$0xff] %vm94, %v443
    %526 = vst.msk [vmem:[#allocation7 + $0x48] sm:$0xff] %vm94, %v446
    %527 = vst.msk [vmem:[#allocation7 + $0x50] sm:$0xff] %vm94, %v466
    %528 = vst.msk [vmem:[#allocation7 + $0x58] sm:$0xff] %vm94, %v469
    %529 = vst.msk [vmem:[#allocation7 + $0x60] sm:$0xff] %vm94, %v489
    %530 = vst.msk [vmem:[#allocation7 + $0x68] sm:$0xff] %vm94, %v492
    %531 = vst.msk [vmem:[#allocation7 + $0x70] sm:$0xff] %vm94, %v512
    %532 = vst.msk [vmem:[#allocation7 + $0x78] sm:$0xff] %vm94, %v515
    // Predicated region
    $region18: #{tpu_custom_call.1} parent=1 // pred_check
      _
    $region19: #{tpu_custom_call.1} parent=1 // pred_check_branch
      %534 = sbr.rel (0) target = $region21
    $region20: #{tpu_custom_call.1} parent=1 // pred_region
      %536 = vsyncadd [#allocation4], 0
      %s537 = sshll.u32 [#allocation7], 4
      %s538 = int_to_ptr.vmem [resolvable:$true] %s537
      %s539 = sshll.u32 %s2, 4
      %s540 = int_to_ptr.hbm [resolvable:$true] %s539
      %545 = dma.vmem_to_hbm [thread:$0]  %s538, 2048, %s540, [#allocation4], 128, 128, 8
    $region21: #{tpu_custom_call.1} parent=1 // pred_fallthru
      _
    // Predicated region
    $region22: #{tpu_custom_call.1} parent=1 // pred_check
      _
    $region23: #{tpu_custom_call.1} parent=1 // pred_check_branch
      %547 = sbr.rel (0) target = $region25
    $region24: #{tpu_custom_call.1} parent=1 // pred_region
      %549 = dma.done [#allocation4], 2048
    $region25: #{tpu_custom_call.1} parent=1 // pred_fallthru
      _
    %550 = vsyncpa [#allocation3], 1
    %551 = vsyncpa [#allocation6], 1
    %552 = vsyncpa [#allocation4], 1

</llo_original>
